<compile_context>
chip_gen: v7x
topology: tpu7x:2x2x1
jax: 0.10.0
libtpu: 0.0.40
codegen_flags: <defaults>
</compile_context>

<pallas_src>
import functools

import jax
import jax.numpy as jnp
import numpy as np
from jax import lax
from jax.experimental import pallas as pl
from jax.experimental.pallas import tpu as pltpu

LANE = 128


def _round_up(x, m):
    return (x + m - 1) // m * m


def _block_kernel(x_ref, wf_ref, bf_ref, wdw_ref, t3_ref, o_ref,
                  rbuf_ref, pad_ref, *, TH, W, CI, CO, K, pad, Hp, Wp, n_t, Wl):
    t = pl.program_id(1)
    THp = TH // 2
    Wtot = Wl + Wp + pad

    # ---------- phase A: fused 1x1 convs + MaxPool2d(2) + ReLU for tile t ----------
    @pl.when(t < n_t)
    def _():
        x = x_ref[0]                                                  # (TH*W, CI) bf16
        # single fused matmul: (conv1+BN1) o (conv2+BN2) folded into (wf, bf)
        h = jnp.dot(x, wf_ref[...],
                    preferred_element_type=jnp.float32) + bf_ref[...]  # (TH*W, CO) f32

        # vertical (row-pair) pool: layout-preserving reshape + aligned slices
        sr = h.reshape(THp, 2 * W, CO)                                # 2 image rows / slab
        rbuf_ref[...] = jnp.maximum(sr[:, :W, :], sr[:, W:, :])       # (THp, W, CO)
        # horizontal (col-pair) pool via strided ref reads, ReLU folded into the max
        pooled = jnp.maximum(
            jnp.maximum(rbuf_ref[:, pl.ds(0, Wp, stride=2), :],
                        rbuf_ref[:, pl.ds(1, Wp, stride=2), :]), 0.0)  # (THp, Wp, CO)

        # zero only the halo of the persistent padded map, once per batch element
        @pl.when(t == 0)
        def _():
            pad_ref[:pad, :, :] = jnp.zeros((pad, Wtot, CO), jnp.float32)
            pad_ref[pad + Hp:, :, :] = jnp.zeros((pad, Wtot, CO), jnp.float32)
            pad_ref[:, :Wl, :] = jnp.zeros((Hp + 2 * pad, Wl, CO), jnp.float32)
            pad_ref[:, Wl + Wp:, :] = jnp.zeros((Hp + 2 * pad, pad, CO), jnp.float32)

        # interior rows for this tile; column start Wl is 8-aligned -> dense stores
        pad_ref[pl.ds(pad + t * THp, THp), pl.ds(Wl, Wp), :] = pooled

    # ---------- phase B: depthwise KxK conv (+BN3) for output strip t-1 ----------
    @pl.when(t >= 1)
    def _():
        base = (t - 1) * THp                       # top padded row of this strip's window
        acc = jnp.zeros((THp, Wp, CO), jnp.float32)
        for kw in range(K):
            # one column-shifted read per kw (K reads per strip instead of K*K slices)
            colblk = pad_ref[pl.ds(base, THp + 2 * pad),
                             pl.ds(Wl - pad + kw, Wp), :]             # (THp+2p, Wp, CO)
            for kh in range(K):
                # kh offset lands on the leading (slab) axis -> free
                acc = acc + colblk[kh:kh + THp, :, :] * wdw_ref[kh * K + kw]
        o_ref[0] = (acc + t3_ref[...]).astype(o_ref.dtype)


def block_forward(x_nchw, params, dim_out, *, act_num=3, stride=2, row_tile=8):
    assert stride == 2, "kernel implements the stride=2 (MaxPool2d(2)) branch"
    B, C_in, H, W = x_nchw.shape
    assert H % 2 == 0 and W % 2 == 0, "stride-2 pooling needs even H and W"
    K = 2 * act_num + 1
    pad = act_num
    Hp, Wp = H // 2, W // 2
    Wl = _round_up(pad, 8)            # 8-aligned left halo -> unmasked interior stores

    # row tile must be even, divide H, and satisfy TH//2 >= pad so the
    # "one tile behind" depthwise schedule only reads rows already produced
    TH = row_tile
    if not (H % TH == 0 and TH % 2 == 0 and TH // 2 >= pad):
        TH = H
    n_t = H // TH
    THp = TH // 2

    wf, bf, wdw, t3 = params
    CI = wf.shape[0]        # lane-padded input channels
    CO = wf.shape[1]        # lane-padded output channels

    # NCHW -> NHWC, zero-pad channels to the 128-lane boundary, cast to bf16
    x_nhwc = jnp.transpose(x_nchw, (0, 2, 3, 1))
    x_nhwc = jnp.pad(x_nhwc, ((0, 0), (0, 0), (0, 0), (0, CI - C_in)))
    x_flat = x_nhwc.reshape(B, H * W, CI).astype(jnp.bfloat16)

    kernel = functools.partial(_block_kernel, TH=TH, W=W, CI=CI, CO=CO, K=K,
                               pad=pad, Hp=Hp, Wp=Wp, n_t=n_t, Wl=Wl)

    out_nhwc = pl.pallas_call(
        kernel,
        out_shape=jax.ShapeDtypeStruct((B, Hp, Wp, CO), jnp.bfloat16),
        grid_spec=pltpu.PrefetchScalarGridSpec(
            num_scalar_prefetch=0,
            grid=(B, n_t + 1),
            in_specs=[
                # clamp: the extra (t == n_t) step reuses tile n_t-1 -> no refetch
                pl.BlockSpec((1, TH * W, CI),
                             lambda b, t: (b, jnp.minimum(t, n_t - 1), 0)),
                pl.BlockSpec((CI, CO), lambda b, t: (0, 0)),     # fused weight (bf16)
                pl.BlockSpec((1, CO), lambda b, t: (0, 0)),      # fused bias (f32)
                pl.BlockSpec((K * K, CO), lambda b, t: (0, 0)),  # depthwise taps
                pl.BlockSpec((1, CO), lambda b, t: (0, 0)),      # BN3 beta
            ],
            # per-strip output blocks; strip t-1 is written at grid step t
            out_specs=pl.BlockSpec((1, THp, Wp, CO),
                                   lambda b, t: (b, jnp.maximum(t - 1, 0), 0, 0)),
            scratch_shapes=[
                pltpu.VMEM((THp, W, CO), jnp.float32),                     # pool staging
                pltpu.VMEM((Hp + 2 * pad, Wl + Wp + pad, CO), jnp.float32),  # padded ReLU map
            ],
        ),
        compiler_params=pltpu.CompilerParams(
            dimension_semantics=("parallel", "arbitrary"),
            vmem_limit_bytes=64 * 1024 * 1024,
        ),
    )(x_flat, wf, bf, wdw, t3)

    out = out_nhwc[..., :dim_out].astype(jnp.float32)   # drop lane padding, back to f32
    return jnp.transpose(out, (0, 3, 1, 2))             # NHWC -> NCHW


# ---------------- deterministic parameter construction (synthetic) ----------------
def init_raw_params(key, dim, dim_out, act_num=3):
    K = 2 * act_num + 1
    ks = jax.random.split(key, 11)
    return dict(
        conv1_w=0.1 * jax.random.normal(ks[0], (dim, dim, 1, 1), jnp.float32),
        conv1_b=0.1 * jax.random.normal(ks[1], (dim,), jnp.float32),
        g1=1.0 + 0.1 * jax.random.normal(ks[2], (dim,), jnp.float32),
        be1=0.1 * jax.random.normal(ks[3], (dim,), jnp.float32),
        conv2_w=0.1 * jax.random.normal(ks[4], (dim_out, dim, 1, 1), jnp.float32),
        conv2_b=0.1 * jax.random.normal(ks[5], (dim_out,), jnp.float32),
        g2=1.0 + 0.1 * jax.random.normal(ks[6], (dim_out,), jnp.float32),
        be2=0.1 * jax.random.normal(ks[7], (dim_out,), jnp.float32),
        act_w=0.02 * jax.random.normal(ks[8], (dim_out, 1, K, K), jnp.float32),
        g3=1.0 + 0.1 * jax.random.normal(ks[9], (dim_out,), jnp.float32),
        be3=0.1 * jax.random.normal(ks[10], (dim_out,), jnp.float32),
    )


def fold_params(raw, eps=1e-6, lane=LANE):
    # eval-mode BN (running_mean=0, running_var=1) folded into conv weight/bias,
    # conv1+BN1 and conv2+BN2 algebraically fused into one matmul (exact: no
    # nonlinearity in between), BN3 scale folded into the depthwise taps,
    # channels zero-padded to lane width.
    C_in = raw["conv1_w"].shape[0]
    C_out = raw["conv2_w"].shape[0]
    K = raw["act_w"].shape[-1]
    CI = _round_up(C_in, lane)
    CO = _round_up(C_out, lane)

    s1 = raw["g1"] / jnp.sqrt(1.0 + eps)
    w1 = (raw["conv1_w"][:, :, 0, 0] * s1[:, None]).T                 # (C_in, C_in) in->out
    b1 = raw["conv1_b"] * s1 + raw["be1"]
    s2 = raw["g2"] / jnp.sqrt(1.0 + eps)
    w2 = (raw["conv2_w"][:, :, 0, 0] * s2[:, None]).T                 # (C_in, C_out)
    b2 = raw["conv2_b"] * s2 + raw["be2"]

    # fuse the two 1x1 convs (+BNs) in f32
    wf = w1 @ w2                                                      # (C_in, C_out)
    bfu = b1 @ w2 + b2                                                # (C_out,)

    s3 = raw["g3"] / jnp.sqrt(1.0 + eps)
    wdw = jnp.transpose(raw["act_w"][:, 0], (1, 2, 0)).reshape(K * K, C_out) * s3[None, :]
    t3 = raw["be3"]

    # zero-pad to lane-dense widths; padded channels stay exactly zero end-to-end
    wfp = jnp.zeros((CI, CO), jnp.float32).at[:C_in, :C_out].set(wf).astype(jnp.bfloat16)
    bfp = jnp.zeros((1, CO), jnp.float32).at[0, :C_out].set(bfu)
    wdwp = jnp.zeros((K * K, CO), jnp.float32).at[:, :C_out].set(wdw)
    t3p = jnp.zeros((1, CO), jnp.float32).at[0, :C_out].set(t3)
    return wfp, bfp, wdwp, t3p


# ---------------- pure-JAX reference (for correctness check only) ----------------
def ref_forward(x, raw, act_num=3, stride=2, eps=1e-6):
    def bn(y, g, b):
        return y * (g / jnp.sqrt(1.0 + eps))[None, :, None, None] + b[None, :, None, None]

    y = jnp.einsum("nchw,oc->nohw", x, raw["conv1_w"][:, :, 0, 0]) \
        + raw["conv1_b"][None, :, None, None]
    y = bn(y, raw["g1"], raw["be1"])
    y = jnp.einsum("nchw,oc->nohw", y, raw["conv2_w"][:, :, 0, 0]) \
        + raw["conv2_b"][None, :, None, None]
    y = bn(y, raw["g2"], raw["be2"])
    N, C, H, W = y.shape
    y = y.reshape(N, C, H // stride, stride, W // stride, stride).max(axis=(3, 5))
    y = jnp.maximum(y, 0.0)
    y = lax.conv_general_dilated(
        y, raw["act_w"], window_strides=(1, 1),
        padding=[(act_num, act_num)] * 2,
        dimension_numbers=("NCHW", "OIHW", "NCHW"),
        feature_group_count=C)
    y = bn(y, raw["g3"], raw["be3"])
    return y


if __name__ == "__main__":
    B, dim, dim_out = 2, 4, 8
    H, W = 16, 16
    act_num, stride = 3, 2

    key = jax.random.PRNGKey(0)
    kx, kp = jax.random.split(key)
    x = jax.random.normal(kx, (B, dim, H, W), jnp.float32)

    raw = init_raw_params(kp, dim, dim_out, act_num)
    params = fold_params(raw)

    out = block_forward(x, params, dim_out, act_num=act_num, stride=stride)
    out = jax.block_until_ready(out)

    assert out.shape == (B, dim_out, H // stride, W // stride)
    ref = ref_forward(x, raw, act_num=act_num, stride=stride)
    # bf16 inputs/weights on the MXU + bf16 output -> loosened tolerance vs f32 reference
    np.testing.assert_allclose(np.asarray(out), np.asarray(ref), rtol=5e-2, atol=1e-2)

    print("KERNEL_OK")
</pallas_src>

<mosaic_0001>
module attributes {stable_mosaic.version = 11 : i64} {
  func.func @_block_kernel(%arg0: i32, %arg1: i32, %arg2: memref<1x128x128xbf16, #tpu.memory_space<vmem>>, %arg3: memref<128x128xbf16, #tpu.memory_space<vmem>>, %arg4: memref<1x128xf32, #tpu.memory_space<vmem>>, %arg5: memref<49x128xf32, #tpu.memory_space<vmem>>, %arg6: memref<1x128xf32, #tpu.memory_space<vmem>>, %arg7: memref<1x4x8x128xbf16, #tpu.memory_space<vmem>>, %arg8: memref<4x16x128xf32, #tpu.memory_space<vmem>>, %arg9: memref<14x19x128xf32, #tpu.memory_space<vmem>>) attributes {dimension_semantics = [#tpu.dimension_semantics<parallel>, #tpu.dimension_semantics<arbitrary>], iteration_bounds = array<i64: 2, 3>, scalar_prefetch = 0 : i64, scratch_operands = 2 : i64, tpu.core_type = #tpu.core_type<tc>, window_params = [{transform_indices = @transform_0, window_bounds = array<i64: 1, 128, 128>}, {pipeline_mode = #tpu.pipeline_mode<synchronous>, transform_indices = @transform_1, window_bounds = array<i64: 128, 128>}, {pipeline_mode = #tpu.pipeline_mode<synchronous>, transform_indices = @transform_2, window_bounds = array<i64: 1, 128>}, {pipeline_mode = #tpu.pipeline_mode<synchronous>, transform_indices = @transform_3, window_bounds = array<i64: 49, 128>}, {pipeline_mode = #tpu.pipeline_mode<synchronous>, transform_indices = @transform_4, window_bounds = array<i64: 1, 128>}, {transform_indices = @transform_5, window_bounds = array<i64: 1, 4, 8, 128>}]} {
    %c2_i32 = arith.constant 2 : i32
    %0 = arith.cmpi slt, %arg1, %c2_i32 : i32
    %1 = arith.extui %0 : i1 to i32
    %c0_i32 = arith.constant 0 : i32
    %2 = arith.cmpi ne, %1, %c0_i32 : i32
    scf.if %2 {
      %c0 = arith.constant 0 : index
      %c0_1 = arith.constant 0 : index
      %c0_2 = arith.constant 0 : index
      %6 = vector.load %arg2[%c0, %c0_1, %c0_2] : memref<1x128x128xbf16, #tpu.memory_space<vmem>>, vector<1x128x128xbf16>
      %7 = vector.shape_cast %6 : vector<1x128x128xbf16> to vector<128x128xbf16>
      %c0_3 = arith.constant 0 : index
      %c0_4 = arith.constant 0 : index
      %8 = vector.load %arg3[%c0_3, %c0_4] : memref<128x128xbf16, #tpu.memory_space<vmem>>, vector<128x128xbf16>
      %cst = arith.constant dense<0.000000e+00> : vector<128x128xf32>
      %9 = tpu.matmul %7, %8, %cst {dimension_numbers = #tpu.dot_dimension_numbers<[1], [0], [0], [1], [0, 0, 1, 1], [], []>} : vector<128x128xbf16>, vector<128x128xbf16>, vector<128x128xf32> -> vector<128x128xf32>
      %c0_5 = arith.constant 0 : index
      %c0_6 = arith.constant 0 : index
      %10 = vector.load %arg4[%c0_5, %c0_6] : memref<1x128xf32, #tpu.memory_space<vmem>>, vector<1x128xf32>
      %11 = vector.broadcast %10 : vector<1x128xf32> to vector<128x128xf32>
      %12 = arith.addf %9, %11 : vector<128x128xf32>
      %13 = vector.shape_cast %12 : vector<128x128xf32> to vector<4x32x128xf32>
      %14 = vector.extract_strided_slice %13 {offsets = [0, 0, 0], sizes = [4, 16, 128], strides = [1, 1, 1]} : vector<4x32x128xf32> to vector<4x16x128xf32>
      %15 = vector.extract_strided_slice %13 {offsets = [0, 16, 0], sizes = [4, 16, 128], strides = [1, 1, 1]} : vector<4x32x128xf32> to vector<4x16x128xf32>
      %16 = arith.maximumf %14, %15 : vector<4x16x128xf32>
      %c0_7 = arith.constant 0 : index
      %c0_8 = arith.constant 0 : index
      %c0_9 = arith.constant 0 : index
      %17 = vector.load %arg8[%c0_7, %c0_8, %c0_9] : memref<4x16x128xf32, #tpu.memory_space<vmem>>, vector<4x16x128xf32>
      tpu.vector_store %arg8[%c0_7, %c0_8, %c0_9], %16 {strides = array<i32>} : memref<4x16x128xf32, #tpu.memory_space<vmem>>, vector<4x16x128xf32>,
      %c0_10 = arith.constant 0 : index
      %c0_11 = arith.constant 0 : index
      %c0_12 = arith.constant 0 : index
      %18 = tpu.strided_load %arg8[%c0_10, %c0_11, %c0_12] {strides = array<i32: 1, 2, 1>} : memref<4x16x128xf32, #tpu.memory_space<vmem>>, vector<4x8x128xf32>
      %c0_13 = arith.constant 0 : index
      %c1 = arith.constant 1 : index
      %c0_14 = arith.constant 0 : index
      %19 = tpu.strided_load %arg8[%c0_13, %c1, %c0_14] {strides = array<i32: 1, 2, 1>} : memref<4x16x128xf32, #tpu.memory_space<vmem>>, vector<4x8x128xf32>
      %20 = arith.maximumf %18, %19 : vector<4x8x128xf32>
      %cst_15 = arith.constant 0.000000e+00 : f32
      %21 = vector.broadcast %cst_15 : f32 to vector<4x8x128xf32>
      %22 = arith.maximumf %20, %21 : vector<4x8x128xf32>
      %c0_i32_16 = arith.constant 0 : i32
      %23 = arith.cmpi eq, %arg1, %c0_i32_16 : i32
      %24 = arith.extui %23 : i1 to i32
      %c0_i32_17 = arith.constant 0 : i32
      %25 = arith.cmpi ne, %24, %c0_i32_17 : i32
      scf.if %25 {
        %cst_19 = arith.constant 0.000000e+00 : f32
        %30 = vector.broadcast %cst_19 : f32 to vector<3x19x128xf32>
        %c0_20 = arith.constant 0 : index
        %c0_21 = arith.constant 0 : index
        %c0_22 = arith.constant 0 : index
        %31 = vector.load %arg9[%c0_20, %c0_21, %c0_22] : memref<14x19x128xf32, #tpu.memory_space<vmem>>, vector<3x19x128xf32>
        tpu.vector_store %arg9[%c0_20, %c0_21, %c0_22], %30 {strides = array<i32>} : memref<14x19x128xf32, #tpu.memory_space<vmem>>, vector<3x19x128xf32>,
        %cst_23 = arith.constant 0.000000e+00 : f32
        %32 = vector.broadcast %cst_23 : f32 to vector<3x19x128xf32>
        %c11 = arith.constant 11 : index
        %c0_24 = arith.constant 0 : index
        %c0_25 = arith.constant 0 : index
        %33 = vector.load %arg9[%c11, %c0_24, %c0_25] : memref<14x19x128xf32, #tpu.memory_space<vmem>>, vector<3x19x128xf32>
        tpu.vector_store %arg9[%c11, %c0_24, %c0_25], %32 {strides = array<i32>} : memref<14x19x128xf32, #tpu.memory_space<vmem>>, vector<3x19x128xf32>,
        %cst_26 = arith.constant 0.000000e+00 : f32
        %34 = vector.broadcast %cst_26 : f32 to vector<14x8x128xf32>
        %c0_27 = arith.constant 0 : index
        %c0_28 = arith.constant 0 : index
        %c0_29 = arith.constant 0 : index
        %35 = vector.load %arg9[%c0_27, %c0_28, %c0_29] : memref<14x19x128xf32, #tpu.memory_space<vmem>>, vector<14x8x128xf32>
        tpu.vector_store %arg9[%c0_27, %c0_28, %c0_29], %34 {strides = array<i32>} : memref<14x19x128xf32, #tpu.memory_space<vmem>>, vector<14x8x128xf32>,
        %cst_30 = arith.constant 0.000000e+00 : f32
        %36 = vector.broadcast %cst_30 : f32 to vector<14x3x128xf32>
        %c0_31 = arith.constant 0 : index
        %c16 = arith.constant 16 : index
        %c0_32 = arith.constant 0 : index
        %37 = vector.load %arg9[%c0_31, %c16, %c0_32] : memref<14x19x128xf32, #tpu.memory_space<vmem>>, vector<14x3x128xf32>
        tpu.vector_store %arg9[%c0_31, %c16, %c0_32], %36 {strides = array<i32>} : memref<14x19x128xf32, #tpu.memory_space<vmem>>, vector<14x3x128xf32>,
      } else {
      }
      %c4_i32 = arith.constant 4 : i32
      %26 = arith.muli %arg1, %c4_i32 : i32
      %c3_i32 = arith.constant 3 : i32
      %27 = arith.addi %c3_i32, %26 : i32
      %28 = arith.index_cast %27 : i32 to index
      %c8 = arith.constant 8 : index
      %c0_18 = arith.constant 0 : index
      %29 = vector.load %arg9[%28, %c8, %c0_18] : memref<14x19x128xf32, #tpu.memory_space<vmem>>, vector<4x8x128xf32>
      tpu.vector_store %arg9[%28, %c8, %c0_18], %22 {strides = array<i32>} : memref<14x19x128xf32, #tpu.memory_space<vmem>>, vector<4x8x128xf32>,
    } else {
    }
    %c1_i32 = arith.constant 1 : i32
    %3 = arith.cmpi sge, %arg1, %c1_i32 : i32
    %4 = arith.extui %3 : i1 to i32
    %c0_i32_0 = arith.constant 0 : i32
    %5 = arith.cmpi ne, %4, %c0_i32_0 : i32
    scf.if %5 {
      %c1_i32_1 = arith.constant 1 : i32
      %6 = arith.subi %arg1, %c1_i32_1 : i32
      %c4_i32 = arith.constant 4 : i32
      %7 = arith.muli %6, %c4_i32 : i32
      %cst = arith.constant 0.000000e+00 : f32
      %8 = vector.broadcast %cst : f32 to vector<4x8x128xf32>
      %9 = arith.index_cast %7 : i32 to index
      %c5 = arith.constant 5 : index
      %c0 = arith.constant 0 : index
      %10 = vector.load %arg9[%9, %c5, %c0] : memref<14x19x128xf32, #tpu.memory_space<vmem>>, vector<10x8x128xf32>
      %11 = vector.extract_strided_slice %10 {offsets = [0, 0, 0], sizes = [4, 8, 128], strides = [1, 1, 1]} : vector<10x8x128xf32> to vector<4x8x128xf32>
      %c0_2 = arith.constant 0 : index
      %c0_3 = arith.constant 0 : index
      %12 = vector.load %arg5[%c0_2, %c0_3] : memref<49x128xf32, #tpu.memory_space<vmem>>, vector<1x128xf32>
      %13 = vector.shape_cast %12 : vector<1x128xf32> to vector<128xf32>
      %14 = vector.shape_cast %13 : vector<128xf32> to vector<1x1x128xf32>
      %15 = vector.broadcast %14 : vector<1x1x128xf32> to vector<4x8x128xf32>
      %16 = arith.mulf %11, %15 : vector<4x8x128xf32>
      %17 = arith.addf %8, %16 : vector<4x8x128xf32>
      %18 = vector.extract_strided_slice %10 {offsets = [1, 0, 0], sizes = [4, 8, 128], strides = [1, 1, 1]} : vector<10x8x128xf32> to vector<4x8x128xf32>
      %c7 = arith.constant 7 : index
      %c0_4 = arith.constant 0 : index
      %19 = vector.load %arg5[%c7, %c0_4] : memref<49x128xf32, #tpu.memory_space<vmem>>, vector<1x128xf32>
      %20 = vector.shape_cast %19 : vector<1x128xf32> to vector<128xf32>
      %21 = vector.shape_cast %20 : vector<128xf32> to vector<1x1x128xf32>
      %22 = vector.broadcast %21 : vector<1x1x128xf32> to vector<4x8x128xf32>
      %23 = arith.mulf %18, %22 : vector<4x8x128xf32>
      %24 = arith.addf %17, %23 : vector<4x8x128xf32>
      %25 = vector.extract_strided_slice %10 {offsets = [2, 0, 0], sizes = [4, 8, 128], strides = [1, 1, 1]} : vector<10x8x128xf32> to vector<4x8x128xf32>
      %c14 = arith.constant 14 : index
      %c0_5 = arith.constant 0 : index
      %26 = vector.load %arg5[%c14, %c0_5] : memref<49x128xf32, #tpu.memory_space<vmem>>, vector<1x128xf32>
      %27 = vector.shape_cast %26 : vector<1x128xf32> to vector<128xf32>
      %28 = vector.shape_cast %27 : vector<128xf32> to vector<1x1x128xf32>
      %29 = vector.broadcast %28 : vector<1x1x128xf32> to vector<4x8x128xf32>
      %30 = arith.mulf %25, %29 : vector<4x8x128xf32>
      %31 = arith.addf %24, %30 : vector<4x8x128xf32>
      %32 = vector.extract_strided_slice %10 {offsets = [3, 0, 0], sizes = [4, 8, 128], strides = [1, 1, 1]} : vector<10x8x128xf32> to vector<4x8x128xf32>
      %c21 = arith.constant 21 : index
      %c0_6 = arith.constant 0 : index
      %33 = vector.load %arg5[%c21, %c0_6] : memref<49x128xf32, #tpu.memory_space<vmem>>, vector<1x128xf32>
      %34 = vector.shape_cast %33 : vector<1x128xf32> to vector<128xf32>
      %35 = vector.shape_cast %34 : vector<128xf32> to vector<1x1x128xf32>
      %36 = vector.broadcast %35 : vector<1x1x128xf32> to vector<4x8x128xf32>
      %37 = arith.mulf %32, %36 : vector<4x8x128xf32>
      %38 = arith.addf %31, %37 : vector<4x8x128xf32>
      %39 = vector.extract_strided_slice %10 {offsets = [4, 0, 0], sizes = [4, 8, 128], strides = [1, 1, 1]} : vector<10x8x128xf32> to vector<4x8x128xf32>
      %c28 = arith.constant 28 : index
      %c0_7 = arith.constant 0 : index
      %40 = vector.load %arg5[%c28, %c0_7] : memref<49x128xf32, #tpu.memory_space<vmem>>, vector<1x128xf32>
      %41 = vector.shape_cast %40 : vector<1x128xf32> to vector<128xf32>
      %42 = vector.shape_cast %41 : vector<128xf32> to vector<1x1x128xf32>
      %43 = vector.broadcast %42 : vector<1x1x128xf32> to vector<4x8x128xf32>
      %44 = arith.mulf %39, %43 : vector<4x8x128xf32>
      %45 = arith.addf %38, %44 : vector<4x8x128xf32>
      %46 = vector.extract_strided_slice %10 {offsets = [5, 0, 0], sizes = [4, 8, 128], strides = [1, 1, 1]} : vector<10x8x128xf32> to vector<4x8x128xf32>
      %c35 = arith.constant 35 : index
      %c0_8 = arith.constant 0 : index
      %47 = vector.load %arg5[%c35, %c0_8] : memref<49x128xf32, #tpu.memory_space<vmem>>, vector<1x128xf32>
      %48 = vector.shape_cast %47 : vector<1x128xf32> to vector<128xf32>
      %49 = vector.shape_cast %48 : vector<128xf32> to vector<1x1x128xf32>
      %50 = vector.broadcast %49 : vector<1x1x128xf32> to vector<4x8x128xf32>
      %51 = arith.mulf %46, %50 : vector<4x8x128xf32>
      %52 = arith.addf %45, %51 : vector<4x8x128xf32>
      %53 = vector.extract_strided_slice %10 {offsets = [6, 0, 0], sizes = [4, 8, 128], strides = [1, 1, 1]} : vector<10x8x128xf32> to vector<4x8x128xf32>
      %c42 = arith.constant 42 : index
      %c0_9 = arith.constant 0 : index
      %54 = vector.load %arg5[%c42, %c0_9] : memref<49x128xf32, #tpu.memory_space<vmem>>, vector<1x128xf32>
      %55 = vector.shape_cast %54 : vector<1x128xf32> to vector<128xf32>
      %56 = vector.shape_cast %55 : vector<128xf32> to vector<1x1x128xf32>
      %57 = vector.broadcast %56 : vector<1x1x128xf32> to vector<4x8x128xf32>
      %58 = arith.mulf %53, %57 : vector<4x8x128xf32>
      %59 = arith.addf %52, %58 : vector<4x8x128xf32>
      %60 = arith.index_cast %7 : i32 to index
      %c6 = arith.constant 6 : index
      %c0_10 = arith.constant 0 : index
      %61 = vector.load %arg9[%60, %c6, %c0_10] : memref<14x19x128xf32, #tpu.memory_space<vmem>>, vector<10x8x128xf32>
      %62 = vector.extract_strided_slice %61 {offsets = [0, 0, 0], sizes = [4, 8, 128], strides = [1, 1, 1]} : vector<10x8x128xf32> to vector<4x8x128xf32>
      %c1 = arith.constant 1 : index
      %c0_11 = arith.constant 0 : index
      %63 = vector.load %arg5[%c1, %c0_11] : memref<49x128xf32, #tpu.memory_space<vmem>>, vector<1x128xf32>
      %64 = vector.shape_cast %63 : vector<1x128xf32> to vector<128xf32>
      %65 = vector.shape_cast %64 : vector<128xf32> to vector<1x1x128xf32>
      %66 = vector.broadcast %65 : vector<1x1x128xf32> to vector<4x8x128xf32>
      %67 = arith.mulf %62, %66 : vector<4x8x128xf32>
      %68 = arith.addf %59, %67 : vector<4x8x128xf32>
      %69 = vector.extract_strided_slice %61 {offsets = [1, 0, 0], sizes = [4, 8, 128], strides = [1, 1, 1]} : vector<10x8x128xf32> to vector<4x8x128xf32>
      %c8 = arith.constant 8 : index
      %c0_12 = arith.constant 0 : index
      %70 = vector.load %arg5[%c8, %c0_12] : memref<49x128xf32, #tpu.memory_space<vmem>>, vector<1x128xf32>
      %71 = vector.shape_cast %70 : vector<1x128xf32> to vector<128xf32>
      %72 = vector.shape_cast %71 : vector<128xf32> to vector<1x1x128xf32>
      %73 = vector.broadcast %72 : vector<1x1x128xf32> to vector<4x8x128xf32>
      %74 = arith.mulf %69, %73 : vector<4x8x128xf32>
      %75 = arith.addf %68, %74 : vector<4x8x128xf32>
      %76 = vector.extract_strided_slice %61 {offsets = [2, 0, 0], sizes = [4, 8, 128], strides = [1, 1, 1]} : vector<10x8x128xf32> to vector<4x8x128xf32>
      %c15 = arith.constant 15 : index
      %c0_13 = arith.constant 0 : index
      %77 = vector.load %arg5[%c15, %c0_13] : memref<49x128xf32, #tpu.memory_space<vmem>>, vector<1x128xf32>
      %78 = vector.shape_cast %77 : vector<1x128xf32> to vector<128xf32>
      %79 = vector.shape_cast %78 : vector<128xf32> to vector<1x1x128xf32>
      %80 = vector.broadcast %79 : vector<1x1x128xf32> to vector<4x8x128xf32>
      %81 = arith.mulf %76, %80 : vector<4x8x128xf32>
      %82 = arith.addf %75, %81 : vector<4x8x128xf32>
      %83 = vector.extract_strided_slice %61 {offsets = [3, 0, 0], sizes = [4, 8, 128], strides = [1, 1, 1]} : vector<10x8x128xf32> to vector<4x8x128xf32>
      %c22 = arith.constant 22 : index
      %c0_14 = arith.constant 0 : index
      %84 = vector.load %arg5[%c22, %c0_14] : memref<49x128xf32, #tpu.memory_space<vmem>>, vector<1x128xf32>
      %85 = vector.shape_cast %84 : vector<1x128xf32> to vector<128xf32>
      %86 = vector.shape_cast %85 : vector<128xf32> to vector<1x1x128xf32>
      %87 = vector.broadcast %86 : vector<1x1x128xf32> to vector<4x8x128xf32>
      %88 = arith.mulf %83, %87 : vector<4x8x128xf32>
      %89 = arith.addf %82, %88 : vector<4x8x128xf32>
      %90 = vector.extract_strided_slice %61 {offsets = [4, 0, 0], sizes = [4, 8, 128], strides = [1, 1, 1]} : vector<10x8x128xf32> to vector<4x8x128xf32>
      %c29 = arith.constant 29 : index
      %c0_15 = arith.constant 0 : index
      %91 = vector.load %arg5[%c29, %c0_15] : memref<49x128xf32, #tpu.memory_space<vmem>>, vector<1x128xf32>
      %92 = vector.shape_cast %91 : vector<1x128xf32> to vector<128xf32>
      %93 = vector.shape_cast %92 : vector<128xf32> to vector<1x1x128xf32>
      %94 = vector.broadcast %93 : vector<1x1x128xf32> to vector<4x8x128xf32>
      %95 = arith.mulf %90, %94 : vector<4x8x128xf32>
      %96 = arith.addf %89, %95 : vector<4x8x128xf32>
      %97 = vector.extract_strided_slice %61 {offsets = [5, 0, 0], sizes = [4, 8, 128], strides = [1, 1, 1]} : vector<10x8x128xf32> to vector<4x8x128xf32>
      %c36 = arith.constant 36 : index
      %c0_16 = arith.constant 0 : index
      %98 = vector.load %arg5[%c36, %c0_16] : memref<49x128xf32, #tpu.memory_space<vmem>>, vector<1x128xf32>
      %99 = vector.shape_cast %98 : vector<1x128xf32> to vector<128xf32>
      %100 = vector.shape_cast %99 : vector<128xf32> to vector<1x1x128xf32>
      %101 = vector.broadcast %100 : vector<1x1x128xf32> to vector<4x8x128xf32>
      %102 = arith.mulf %97, %101 : vector<4x8x128xf32>
      %103 = arith.addf %96, %102 : vector<4x8x128xf32>
      %104 = vector.extract_strided_slice %61 {offsets = [6, 0, 0], sizes = [4, 8, 128], strides = [1, 1, 1]} : vector<10x8x128xf32> to vector<4x8x128xf32>
      %c43 = arith.constant 43 : index
      %c0_17 = arith.constant 0 : index
      %105 = vector.load %arg5[%c43, %c0_17] : memref<49x128xf32, #tpu.memory_space<vmem>>, vector<1x128xf32>
      %106 = vector.shape_cast %105 : vector<1x128xf32> to vector<128xf32>
      %107 = vector.shape_cast %106 : vector<128xf32> to vector<1x1x128xf32>
      %108 = vector.broadcast %107 : vector<1x1x128xf32> to vector<4x8x128xf32>
      %109 = arith.mulf %104, %108 : vector<4x8x128xf32>
      %110 = arith.addf %103, %109 : vector<4x8x128xf32>
      %111 = arith.index_cast %7 : i32 to index
      %c7_18 = arith.constant 7 : index
      %c0_19 = arith.constant 0 : index
      %112 = vector.load %arg9[%111, %c7_18, %c0_19] : memref<14x19x128xf32, #tpu.memory_space<vmem>>, vector<10x8x128xf32>
      %113 = vector.extract_strided_slice %112 {offsets = [0, 0, 0], sizes = [4, 8, 128], strides = [1, 1, 1]} : vector<10x8x128xf32> to vector<4x8x128xf32>
      %c2 = arith.constant 2 : index
      %c0_20 = arith.constant 0 : index
      %114 = vector.load %arg5[%c2, %c0_20] : memref<49x128xf32, #tpu.memory_space<vmem>>, vector<1x128xf32>
      %115 = vector.shape_cast %114 : vector<1x128xf32> to vector<128xf32>
      %116 = vector.shape_cast %115 : vector<128xf32> to vector<1x1x128xf32>
      %117 = vector.broadcast %116 : vector<1x1x128xf32> to vector<4x8x128xf32>
      %118 = arith.mulf %113, %117 : vector<4x8x128xf32>
      %119 = arith.addf %110, %118 : vector<4x8x128xf32>
      %120 = vector.extract_strided_slice %112 {offsets = [1, 0, 0], sizes = [4, 8, 128], strides = [1, 1, 1]} : vector<10x8x128xf32> to vector<4x8x128xf32>
      %c9 = arith.constant 9 : index
      %c0_21 = arith.constant 0 : index
      %121 = vector.load %arg5[%c9, %c0_21] : memref<49x128xf32, #tpu.memory_space<vmem>>, vector<1x128xf32>
      %122 = vector.shape_cast %121 : vector<1x128xf32> to vector<128xf32>
      %123 = vector.shape_cast %122 : vector<128xf32> to vector<1x1x128xf32>
      %124 = vector.broadcast %123 : vector<1x1x128xf32> to vector<4x8x128xf32>
      %125 = arith.mulf %120, %124 : vector<4x8x128xf32>
      %126 = arith.addf %119, %125 : vector<4x8x128xf32>
      %127 = vector.extract_strided_slice %112 {offsets = [2, 0, 0], sizes = [4, 8, 128], strides = [1, 1, 1]} : vector<10x8x128xf32> to vector<4x8x128xf32>
      %c16 = arith.constant 16 : index
      %c0_22 = arith.constant 0 : index
      %128 = vector.load %arg5[%c16, %c0_22] : memref<49x128xf32, #tpu.memory_space<vmem>>, vector<1x128xf32>
      %129 = vector.shape_cast %128 : vector<1x128xf32> to vector<128xf32>
      %130 = vector.shape_cast %129 : vector<128xf32> to vector<1x1x128xf32>
      %131 = vector.broadcast %130 : vector<1x1x128xf32> to vector<4x8x128xf32>
      %132 = arith.mulf %127, %131 : vector<4x8x128xf32>
      %133 = arith.addf %126, %132 : vector<4x8x128xf32>
      %134 = vector.extract_strided_slice %112 {offsets = [3, 0, 0], sizes = [4, 8, 128], strides = [1, 1, 1]} : vector<10x8x128xf32> to vector<4x8x128xf32>
      %c23 = arith.constant 23 : index
      %c0_23 = arith.constant 0 : index
      %135 = vector.load %arg5[%c23, %c0_23] : memref<49x128xf32, #tpu.memory_space<vmem>>, vector<1x128xf32>
      %136 = vector.shape_cast %135 : vector<1x128xf32> to vector<128xf32>
      %137 = vector.shape_cast %136 : vector<128xf32> to vector<1x1x128xf32>
      %138 = vector.broadcast %137 : vector<1x1x128xf32> to vector<4x8x128xf32>
      %139 = arith.mulf %134, %138 : vector<4x8x128xf32>
      %140 = arith.addf %133, %139 : vector<4x8x128xf32>
      %141 = vector.extract_strided_slice %112 {offsets = [4, 0, 0], sizes = [4, 8, 128], strides = [1, 1, 1]} : vector<10x8x128xf32> to vector<4x8x128xf32>
      %c30 = arith.constant 30 : index
      %c0_24 = arith.constant 0 : index
      %142 = vector.load %arg5[%c30, %c0_24] : memref<49x128xf32, #tpu.memory_space<vmem>>, vector<1x128xf32>
      %143 = vector.shape_cast %142 : vector<1x128xf32> to vector<128xf32>
      %144 = vector.shape_cast %143 : vector<128xf32> to vector<1x1x128xf32>
      %145 = vector.broadcast %144 : vector<1x1x128xf32> to vector<4x8x128xf32>
      %146 = arith.mulf %141, %145 : vector<4x8x128xf32>
      %147 = arith.addf %140, %146 : vector<4x8x128xf32>
      %148 = vector.extract_strided_slice %112 {offsets = [5, 0, 0], sizes = [4, 8, 128], strides = [1, 1, 1]} : vector<10x8x128xf32> to vector<4x8x128xf32>
      %c37 = arith.constant 37 : index
      %c0_25 = arith.constant 0 : index
      %149 = vector.load %arg5[%c37, %c0_25] : memref<49x128xf32, #tpu.memory_space<vmem>>, vector<1x128xf32>
      %150 = vector.shape_cast %149 : vector<1x128xf32> to vector<128xf32>
      %151 = vector.shape_cast %150 : vector<128xf32> to vector<1x1x128xf32>
      %152 = vector.broadcast %151 : vector<1x1x128xf32> to vector<4x8x128xf32>
      %153 = arith.mulf %148, %152 : vector<4x8x128xf32>
      %154 = arith.addf %147, %153 : vector<4x8x128xf32>
      %155 = vector.extract_strided_slice %112 {offsets = [6, 0, 0], sizes = [4, 8, 128], strides = [1, 1, 1]} : vector<10x8x128xf32> to vector<4x8x128xf32>
      %c44 = arith.constant 44 : index
      %c0_26 = arith.constant 0 : index
      %156 = vector.load %arg5[%c44, %c0_26] : memref<49x128xf32, #tpu.memory_space<vmem>>, vector<1x128xf32>
      %157 = vector.shape_cast %156 : vector<1x128xf32> to vector<128xf32>
      %158 = vector.shape_cast %157 : vector<128xf32> to vector<1x1x128xf32>
      %159 = vector.broadcast %158 : vector<1x1x128xf32> to vector<4x8x128xf32>
      %160 = arith.mulf %155, %159 : vector<4x8x128xf32>
      %161 = arith.addf %154, %160 : vector<4x8x128xf32>
      %162 = arith.index_cast %7 : i32 to index
      %c8_27 = arith.constant 8 : index
      %c0_28 = arith.constant 0 : index
      %163 = vector.load %arg9[%162, %c8_27, %c0_28] : memref<14x19x128xf32, #tpu.memory_space<vmem>>, vector<10x8x128xf32>
      %164 = vector.extract_strided_slice %163 {offsets = [0, 0, 0], sizes = [4, 8, 128], strides = [1, 1, 1]} : vector<10x8x128xf32> to vector<4x8x128xf32>
      %c3 = arith.constant 3 : index
      %c0_29 = arith.constant 0 : index
      %165 = vector.load %arg5[%c3, %c0_29] : memref<49x128xf32, #tpu.memory_space<vmem>>, vector<1x128xf32>
      %166 = vector.shape_cast %165 : vector<1x128xf32> to vector<128xf32>
      %167 = vector.shape_cast %166 : vector<128xf32> to vector<1x1x128xf32>
      %168 = vector.broadcast %167 : vector<1x1x128xf32> to vector<4x8x128xf32>
      %169 = arith.mulf %164, %168 : vector<4x8x128xf32>
      %170 = arith.addf %161, %169 : vector<4x8x128xf32>
      %171 = vector.extract_strided_slice %163 {offsets = [1, 0, 0], sizes = [4, 8, 128], strides = [1, 1, 1]} : vector<10x8x128xf32> to vector<4x8x128xf32>
      %c10 = arith.constant 10 : index
      %c0_30 = arith.constant 0 : index
      %172 = vector.load %arg5[%c10, %c0_30] : memref<49x128xf32, #tpu.memory_space<vmem>>, vector<1x128xf32>
      %173 = vector.shape_cast %172 : vector<1x128xf32> to vector<128xf32>
      %174 = vector.shape_cast %173 : vector<128xf32> to vector<1x1x128xf32>
      %175 = vector.broadcast %174 : vector<1x1x128xf32> to vector<4x8x128xf32>
      %176 = arith.mulf %171, %175 : vector<4x8x128xf32>
      %177 = arith.addf %170, %176 : vector<4x8x128xf32>
      %178 = vector.extract_strided_slice %163 {offsets = [2, 0, 0], sizes = [4, 8, 128], strides = [1, 1, 1]} : vector<10x8x128xf32> to vector<4x8x128xf32>
      %c17 = arith.constant 17 : index
      %c0_31 = arith.constant 0 : index
      %179 = vector.load %arg5[%c17, %c0_31] : memref<49x128xf32, #tpu.memory_space<vmem>>, vector<1x128xf32>
      %180 = vector.shape_cast %179 : vector<1x128xf32> to vector<128xf32>
      %181 = vector.shape_cast %180 : vector<128xf32> to vector<1x1x128xf32>
      %182 = vector.broadcast %181 : vector<1x1x128xf32> to vector<4x8x128xf32>
      %183 = arith.mulf %178, %182 : vector<4x8x128xf32>
      %184 = arith.addf %177, %183 : vector<4x8x128xf32>
      %185 = vector.extract_strided_slice %163 {offsets = [3, 0, 0], sizes = [4, 8, 128], strides = [1, 1, 1]} : vector<10x8x128xf32> to vector<4x8x128xf32>
      %c24 = arith.constant 24 : index
      %c0_32 = arith.constant 0 : index
      %186 = vector.load %arg5[%c24, %c0_32] : memref<49x128xf32, #tpu.memory_space<vmem>>, vector<1x128xf32>
      %187 = vector.shape_cast %186 : vector<1x128xf32> to vector<128xf32>
      %188 = vector.shape_cast %187 : vector<128xf32> to vector<1x1x128xf32>
      %189 = vector.broadcast %188 : vector<1x1x128xf32> to vector<4x8x128xf32>
      %190 = arith.mulf %185, %189 : vector<4x8x128xf32>
      %191 = arith.addf %184, %190 : vector<4x8x128xf32>
      %192 = vector.extract_strided_slice %163 {offsets = [4, 0, 0], sizes = [4, 8, 128], strides = [1, 1, 1]} : vector<10x8x128xf32> to vector<4x8x128xf32>
      %c31 = arith.constant 31 : index
      %c0_33 = arith.constant 0 : index
      %193 = vector.load %arg5[%c31, %c0_33] : memref<49x128xf32, #tpu.memory_space<vmem>>, vector<1x128xf32>
      %194 = vector.shape_cast %193 : vector<1x128xf32> to vector<128xf32>
      %195 = vector.shape_cast %194 : vector<128xf32> to vector<1x1x128xf32>
      %196 = vector.broadcast %195 : vector<1x1x128xf32> to vector<4x8x128xf32>
      %197 = arith.mulf %192, %196 : vector<4x8x128xf32>
      %198 = arith.addf %191, %197 : vector<4x8x128xf32>
      %199 = vector.extract_strided_slice %163 {offsets = [5, 0, 0], sizes = [4, 8, 128], strides = [1, 1, 1]} : vector<10x8x128xf32> to vector<4x8x128xf32>
      %c38 = arith.constant 38 : index
      %c0_34 = arith.constant 0 : index
      %200 = vector.load %arg5[%c38, %c0_34] : memref<49x128xf32, #tpu.memory_space<vmem>>, vector<1x128xf32>
      %201 = vector.shape_cast %200 : vector<1x128xf32> to vector<128xf32>
      %202 = vector.shape_cast %201 : vector<128xf32> to vector<1x1x128xf32>
      %203 = vector.broadcast %202 : vector<1x1x128xf32> to vector<4x8x128xf32>
      %204 = arith.mulf %199, %203 : vector<4x8x128xf32>
      %205 = arith.addf %198, %204 : vector<4x8x128xf32>
      %206 = vector.extract_strided_slice %163 {offsets = [6, 0, 0], sizes = [4, 8, 128], strides = [1, 1, 1]} : vector<10x8x128xf32> to vector<4x8x128xf32>
      %c45 = arith.constant 45 : index
      %c0_35 = arith.constant 0 : index
      %207 = vector.load %arg5[%c45, %c0_35] : memref<49x128xf32, #tpu.memory_space<vmem>>, vector<1x128xf32>
      %208 = vector.shape_cast %207 : vector<1x128xf32> to vector<128xf32>
      %209 = vector.shape_cast %208 : vector<128xf32> to vector<1x1x128xf32>
      %210 = vector.broadcast %209 : vector<1x1x128xf32> to vector<4x8x128xf32>
      %211 = arith.mulf %206, %210 : vector<4x8x128xf32>
      %212 = arith.addf %205, %211 : vector<4x8x128xf32>
      %213 = arith.index_cast %7 : i32 to index
      %c9_36 = arith.constant 9 : index
      %c0_37 = arith.constant 0 : index
      %214 = vector.load %arg9[%213, %c9_36, %c0_37] : memref<14x19x128xf32, #tpu.memory_space<vmem>>, vector<10x8x128xf32>
      %215 = vector.extract_strided_slice %214 {offsets = [0, 0, 0], sizes = [4, 8, 128], strides = [1, 1, 1]} : vector<10x8x128xf32> to vector<4x8x128xf32>
      %c4 = arith.constant 4 : index
      %c0_38 = arith.constant 0 : index
      %216 = vector.load %arg5[%c4, %c0_38] : memref<49x128xf32, #tpu.memory_space<vmem>>, vector<1x128xf32>
      %217 = vector.shape_cast %216 : vector<1x128xf32> to vector<128xf32>
      %218 = vector.shape_cast %217 : vector<128xf32> to vector<1x1x128xf32>
      %219 = vector.broadcast %218 : vector<1x1x128xf32> to vector<4x8x128xf32>
      %220 = arith.mulf %215, %219 : vector<4x8x128xf32>
      %221 = arith.addf %212, %220 : vector<4x8x128xf32>
      %222 = vector.extract_strided_slice %214 {offsets = [1, 0, 0], sizes = [4, 8, 128], strides = [1, 1, 1]} : vector<10x8x128xf32> to vector<4x8x128xf32>
      %c11 = arith.constant 11 : index
      %c0_39 = arith.constant 0 : index
      %223 = vector.load %arg5[%c11, %c0_39] : memref<49x128xf32, #tpu.memory_space<vmem>>, vector<1x128xf32>
      %224 = vector.shape_cast %223 : vector<1x128xf32> to vector<128xf32>
      %225 = vector.shape_cast %224 : vector<128xf32> to vector<1x1x128xf32>
      %226 = vector.broadcast %225 : vector<1x1x128xf32> to vector<4x8x128xf32>
      %227 = arith.mulf %222, %226 : vector<4x8x128xf32>
      %228 = arith.addf %221, %227 : vector<4x8x128xf32>
      %229 = vector.extract_strided_slice %214 {offsets = [2, 0, 0], sizes = [4, 8, 128], strides = [1, 1, 1]} : vector<10x8x128xf32> to vector<4x8x128xf32>
      %c18 = arith.constant 18 : index
      %c0_40 = arith.constant 0 : index
      %230 = vector.load %arg5[%c18, %c0_40] : memref<49x128xf32, #tpu.memory_space<vmem>>, vector<1x128xf32>
      %231 = vector.shape_cast %230 : vector<1x128xf32> to vector<128xf32>
      %232 = vector.shape_cast %231 : vector<128xf32> to vector<1x1x128xf32>
      %233 = vector.broadcast %232 : vector<1x1x128xf32> to vector<4x8x128xf32>
      %234 = arith.mulf %229, %233 : vector<4x8x128xf32>
      %235 = arith.addf %228, %234 : vector<4x8x128xf32>
      %236 = vector.extract_strided_slice %214 {offsets = [3, 0, 0], sizes = [4, 8, 128], strides = [1, 1, 1]} : vector<10x8x128xf32> to vector<4x8x128xf32>
      %c25 = arith.constant 25 : index
      %c0_41 = arith.constant 0 : index
      %237 = vector.load %arg5[%c25, %c0_41] : memref<49x128xf32, #tpu.memory_space<vmem>>, vector<1x128xf32>
      %238 = vector.shape_cast %237 : vector<1x128xf32> to vector<128xf32>
      %239 = vector.shape_cast %238 : vector<128xf32> to vector<1x1x128xf32>
      %240 = vector.broadcast %239 : vector<1x1x128xf32> to vector<4x8x128xf32>
      %241 = arith.mulf %236, %240 : vector<4x8x128xf32>
      %242 = arith.addf %235, %241 : vector<4x8x128xf32>
      %243 = vector.extract_strided_slice %214 {offsets = [4, 0, 0], sizes = [4, 8, 128], strides = [1, 1, 1]} : vector<10x8x128xf32> to vector<4x8x128xf32>
      %c32 = arith.constant 32 : index
      %c0_42 = arith.constant 0 : index
      %244 = vector.load %arg5[%c32, %c0_42] : memref<49x128xf32, #tpu.memory_space<vmem>>, vector<1x128xf32>
      %245 = vector.shape_cast %244 : vector<1x128xf32> to vector<128xf32>
      %246 = vector.shape_cast %245 : vector<128xf32> to vector<1x1x128xf32>
      %247 = vector.broadcast %246 : vector<1x1x128xf32> to vector<4x8x128xf32>
      %248 = arith.mulf %243, %247 : vector<4x8x128xf32>
      %249 = arith.addf %242, %248 : vector<4x8x128xf32>
      %250 = vector.extract_strided_slice %214 {offsets = [5, 0, 0], sizes = [4, 8, 128], strides = [1, 1, 1]} : vector<10x8x128xf32> to vector<4x8x128xf32>
      %c39 = arith.constant 39 : index
      %c0_43 = arith.constant 0 : index
      %251 = vector.load %arg5[%c39, %c0_43] : memref<49x128xf32, #tpu.memory_space<vmem>>, vector<1x128xf32>
      %252 = vector.shape_cast %251 : vector<1x128xf32> to vector<128xf32>
      %253 = vector.shape_cast %252 : vector<128xf32> to vector<1x1x128xf32>
      %254 = vector.broadcast %253 : vector<1x1x128xf32> to vector<4x8x128xf32>
      %255 = arith.mulf %250, %254 : vector<4x8x128xf32>
      %256 = arith.addf %249, %255 : vector<4x8x128xf32>
      %257 = vector.extract_strided_slice %214 {offsets = [6, 0, 0], sizes = [4, 8, 128], strides = [1, 1, 1]} : vector<10x8x128xf32> to vector<4x8x128xf32>
      %c46 = arith.constant 46 : index
      %c0_44 = arith.constant 0 : index
      %258 = vector.load %arg5[%c46, %c0_44] : memref<49x128xf32, #tpu.memory_space<vmem>>, vector<1x128xf32>
      %259 = vector.shape_cast %258 : vector<1x128xf32> to vector<128xf32>
      %260 = vector.shape_cast %259 : vector<128xf32> to vector<1x1x128xf32>
      %261 = vector.broadcast %260 : vector<1x1x128xf32> to vector<4x8x128xf32>
      %262 = arith.mulf %257, %261 : vector<4x8x128xf32>
      %263 = arith.addf %256, %262 : vector<4x8x128xf32>
      %264 = arith.index_cast %7 : i32 to index
      %c10_45 = arith.constant 10 : index
      %c0_46 = arith.constant 0 : index
      %265 = vector.load %arg9[%264, %c10_45, %c0_46] : memref<14x19x128xf32, #tpu.memory_space<vmem>>, vector<10x8x128xf32>
      %266 = vector.extract_strided_slice %265 {offsets = [0, 0, 0], sizes = [4, 8, 128], strides = [1, 1, 1]} : vector<10x8x128xf32> to vector<4x8x128xf32>
      %c5_47 = arith.constant 5 : index
      %c0_48 = arith.constant 0 : index
      %267 = vector.load %arg5[%c5_47, %c0_48] : memref<49x128xf32, #tpu.memory_space<vmem>>, vector<1x128xf32>
      %268 = vector.shape_cast %267 : vector<1x128xf32> to vector<128xf32>
      %269 = vector.shape_cast %268 : vector<128xf32> to vector<1x1x128xf32>
      %270 = vector.broadcast %269 : vector<1x1x128xf32> to vector<4x8x128xf32>
      %271 = arith.mulf %266, %270 : vector<4x8x128xf32>
      %272 = arith.addf %263, %271 : vector<4x8x128xf32>
      %273 = vector.extract_strided_slice %265 {offsets = [1, 0, 0], sizes = [4, 8, 128], strides = [1, 1, 1]} : vector<10x8x128xf32> to vector<4x8x128xf32>
      %c12 = arith.constant 12 : index
      %c0_49 = arith.constant 0 : index
      %274 = vector.load %arg5[%c12, %c0_49] : memref<49x128xf32, #tpu.memory_space<vmem>>, vector<1x128xf32>
      %275 = vector.shape_cast %274 : vector<1x128xf32> to vector<128xf32>
      %276 = vector.shape_cast %275 : vector<128xf32> to vector<1x1x128xf32>
      %277 = vector.broadcast %276 : vector<1x1x128xf32> to vector<4x8x128xf32>
      %278 = arith.mulf %273, %277 : vector<4x8x128xf32>
      %279 = arith.addf %272, %278 : vector<4x8x128xf32>
      %280 = vector.extract_strided_slice %265 {offsets = [2, 0, 0], sizes = [4, 8, 128], strides = [1, 1, 1]} : vector<10x8x128xf32> to vector<4x8x128xf32>
      %c19 = arith.constant 19 : index
      %c0_50 = arith.constant 0 : index
      %281 = vector.load %arg5[%c19, %c0_50] : memref<49x128xf32, #tpu.memory_space<vmem>>, vector<1x128xf32>
      %282 = vector.shape_cast %281 : vector<1x128xf32> to vector<128xf32>
      %283 = vector.shape_cast %282 : vector<128xf32> to vector<1x1x128xf32>
      %284 = vector.broadcast %283 : vector<1x1x128xf32> to vector<4x8x128xf32>
      %285 = arith.mulf %280, %284 : vector<4x8x128xf32>
      %286 = arith.addf %279, %285 : vector<4x8x128xf32>
      %287 = vector.extract_strided_slice %265 {offsets = [3, 0, 0], sizes = [4, 8, 128], strides = [1, 1, 1]} : vector<10x8x128xf32> to vector<4x8x128xf32>
      %c26 = arith.constant 26 : index
      %c0_51 = arith.constant 0 : index
      %288 = vector.load %arg5[%c26, %c0_51] : memref<49x128xf32, #tpu.memory_space<vmem>>, vector<1x128xf32>
      %289 = vector.shape_cast %288 : vector<1x128xf32> to vector<128xf32>
      %290 = vector.shape_cast %289 : vector<128xf32> to vector<1x1x128xf32>
      %291 = vector.broadcast %290 : vector<1x1x128xf32> to vector<4x8x128xf32>
      %292 = arith.mulf %287, %291 : vector<4x8x128xf32>
      %293 = arith.addf %286, %292 : vector<4x8x128xf32>
      %294 = vector.extract_strided_slice %265 {offsets = [4, 0, 0], sizes = [4, 8, 128], strides = [1, 1, 1]} : vector<10x8x128xf32> to vector<4x8x128xf32>
      %c33 = arith.constant 33 : index
      %c0_52 = arith.constant 0 : index
      %295 = vector.load %arg5[%c33, %c0_52] : memref<49x128xf32, #tpu.memory_space<vmem>>, vector<1x128xf32>
      %296 = vector.shape_cast %295 : vector<1x128xf32> to vector<128xf32>
      %297 = vector.shape_cast %296 : vector<128xf32> to vector<1x1x128xf32>
      %298 = vector.broadcast %297 : vector<1x1x128xf32> to vector<4x8x128xf32>
      %299 = arith.mulf %294, %298 : vector<4x8x128xf32>
      %300 = arith.addf %293, %299 : vector<4x8x128xf32>
      %301 = vector.extract_strided_slice %265 {offsets = [5, 0, 0], sizes = [4, 8, 128], strides = [1, 1, 1]} : vector<10x8x128xf32> to vector<4x8x128xf32>
      %c40 = arith.constant 40 : index
      %c0_53 = arith.constant 0 : index
      %302 = vector.load %arg5[%c40, %c0_53] : memref<49x128xf32, #tpu.memory_space<vmem>>, vector<1x128xf32>
      %303 = vector.shape_cast %302 : vector<1x128xf32> to vector<128xf32>
      %304 = vector.shape_cast %303 : vector<128xf32> to vector<1x1x128xf32>
      %305 = vector.broadcast %304 : vector<1x1x128xf32> to vector<4x8x128xf32>
      %306 = arith.mulf %301, %305 : vector<4x8x128xf32>
      %307 = arith.addf %300, %306 : vector<4x8x128xf32>
      %308 = vector.extract_strided_slice %265 {offsets = [6, 0, 0], sizes = [4, 8, 128], strides = [1, 1, 1]} : vector<10x8x128xf32> to vector<4x8x128xf32>
      %c47 = arith.constant 47 : index
      %c0_54 = arith.constant 0 : index
      %309 = vector.load %arg5[%c47, %c0_54] : memref<49x128xf32, #tpu.memory_space<vmem>>, vector<1x128xf32>
      %310 = vector.shape_cast %309 : vector<1x128xf32> to vector<128xf32>
      %311 = vector.shape_cast %310 : vector<128xf32> to vector<1x1x128xf32>
      %312 = vector.broadcast %311 : vector<1x1x128xf32> to vector<4x8x128xf32>
      %313 = arith.mulf %308, %312 : vector<4x8x128xf32>
      %314 = arith.addf %307, %313 : vector<4x8x128xf32>
      %315 = arith.index_cast %7 : i32 to index
      %c11_55 = arith.constant 11 : index
      %c0_56 = arith.constant 0 : index
      %316 = vector.load %arg9[%315, %c11_55, %c0_56] : memref<14x19x128xf32, #tpu.memory_space<vmem>>, vector<10x8x128xf32>
      %317 = vector.extract_strided_slice %316 {offsets = [0, 0, 0], sizes = [4, 8, 128], strides = [1, 1, 1]} : vector<10x8x128xf32> to vector<4x8x128xf32>
      %c6_57 = arith.constant 6 : index
      %c0_58 = arith.constant 0 : index
      %318 = vector.load %arg5[%c6_57, %c0_58] : memref<49x128xf32, #tpu.memory_space<vmem>>, vector<1x128xf32>
      %319 = vector.shape_cast %318 : vector<1x128xf32> to vector<128xf32>
      %320 = vector.shape_cast %319 : vector<128xf32> to vector<1x1x128xf32>
      %321 = vector.broadcast %320 : vector<1x1x128xf32> to vector<4x8x128xf32>
      %322 = arith.mulf %317, %321 : vector<4x8x128xf32>
      %323 = arith.addf %314, %322 : vector<4x8x128xf32>
      %324 = vector.extract_strided_slice %316 {offsets = [1, 0, 0], sizes = [4, 8, 128], strides = [1, 1, 1]} : vector<10x8x128xf32> to vector<4x8x128xf32>
      %c13 = arith.constant 13 : index
      %c0_59 = arith.constant 0 : index
      %325 = vector.load %arg5[%c13, %c0_59] : memref<49x128xf32, #tpu.memory_space<vmem>>, vector<1x128xf32>
      %326 = vector.shape_cast %325 : vector<1x128xf32> to vector<128xf32>
      %327 = vector.shape_cast %326 : vector<128xf32> to vector<1x1x128xf32>
      %328 = vector.broadcast %327 : vector<1x1x128xf32> to vector<4x8x128xf32>
      %329 = arith.mulf %324, %328 : vector<4x8x128xf32>
      %330 = arith.addf %323, %329 : vector<4x8x128xf32>
      %331 = vector.extract_strided_slice %316 {offsets = [2, 0, 0], sizes = [4, 8, 128], strides = [1, 1, 1]} : vector<10x8x128xf32> to vector<4x8x128xf32>
      %c20 = arith.constant 20 : index
      %c0_60 = arith.constant 0 : index
      %332 = vector.load %arg5[%c20, %c0_60] : memref<49x128xf32, #tpu.memory_space<vmem>>, vector<1x128xf32>
      %333 = vector.shape_cast %332 : vector<1x128xf32> to vector<128xf32>
      %334 = vector.shape_cast %333 : vector<128xf32> to vector<1x1x128xf32>
      %335 = vector.broadcast %334 : vector<1x1x128xf32> to vector<4x8x128xf32>
      %336 = arith.mulf %331, %335 : vector<4x8x128xf32>
      %337 = arith.addf %330, %336 : vector<4x8x128xf32>
      %338 = vector.extract_strided_slice %316 {offsets = [3, 0, 0], sizes = [4, 8, 128], strides = [1, 1, 1]} : vector<10x8x128xf32> to vector<4x8x128xf32>
      %c27 = arith.constant 27 : index
      %c0_61 = arith.constant 0 : index
      %339 = vector.load %arg5[%c27, %c0_61] : memref<49x128xf32, #tpu.memory_space<vmem>>, vector<1x128xf32>
      %340 = vector.shape_cast %339 : vector<1x128xf32> to vector<128xf32>
      %341 = vector.shape_cast %340 : vector<128xf32> to vector<1x1x128xf32>
      %342 = vector.broadcast %341 : vector<1x1x128xf32> to vector<4x8x128xf32>
      %343 = arith.mulf %338, %342 : vector<4x8x128xf32>
      %344 = arith.addf %337, %343 : vector<4x8x128xf32>
      %345 = vector.extract_strided_slice %316 {offsets = [4, 0, 0], sizes = [4, 8, 128], strides = [1, 1, 1]} : vector<10x8x128xf32> to vector<4x8x128xf32>
      %c34 = arith.constant 34 : index
      %c0_62 = arith.constant 0 : index
      %346 = vector.load %arg5[%c34, %c0_62] : memref<49x128xf32, #tpu.memory_space<vmem>>, vector<1x128xf32>
      %347 = vector.shape_cast %346 : vector<1x128xf32> to vector<128xf32>
      %348 = vector.shape_cast %347 : vector<128xf32> to vector<1x1x128xf32>
      %349 = vector.broadcast %348 : vector<1x1x128xf32> to vector<4x8x128xf32>
      %350 = arith.mulf %345, %349 : vector<4x8x128xf32>
      %351 = arith.addf %344, %350 : vector<4x8x128xf32>
      %352 = vector.extract_strided_slice %316 {offsets = [5, 0, 0], sizes = [4, 8, 128], strides = [1, 1, 1]} : vector<10x8x128xf32> to vector<4x8x128xf32>
      %c41 = arith.constant 41 : index
      %c0_63 = arith.constant 0 : index
      %353 = vector.load %arg5[%c41, %c0_63] : memref<49x128xf32, #tpu.memory_space<vmem>>, vector<1x128xf32>
      %354 = vector.shape_cast %353 : vector<1x128xf32> to vector<128xf32>
      %355 = vector.shape_cast %354 : vector<128xf32> to vector<1x1x128xf32>
      %356 = vector.broadcast %355 : vector<1x1x128xf32> to vector<4x8x128xf32>
      %357 = arith.mulf %352, %356 : vector<4x8x128xf32>
      %358 = arith.addf %351, %357 : vector<4x8x128xf32>
      %359 = vector.extract_strided_slice %316 {offsets = [6, 0, 0], sizes = [4, 8, 128], strides = [1, 1, 1]} : vector<10x8x128xf32> to vector<4x8x128xf32>
      %c48 = arith.constant 48 : index
      %c0_64 = arith.constant 0 : index
      %360 = vector.load %arg5[%c48, %c0_64] : memref<49x128xf32, #tpu.memory_space<vmem>>, vector<1x128xf32>
      %361 = vector.shape_cast %360 : vector<1x128xf32> to vector<128xf32>
      %362 = vector.shape_cast %361 : vector<128xf32> to vector<1x1x128xf32>
      %363 = vector.broadcast %362 : vector<1x1x128xf32> to vector<4x8x128xf32>
      %364 = arith.mulf %359, %363 : vector<4x8x128xf32>
      %365 = arith.addf %358, %364 : vector<4x8x128xf32>
      %c0_65 = arith.constant 0 : index
      %c0_66 = arith.constant 0 : index
      %366 = vector.load %arg6[%c0_65, %c0_66] : memref<1x128xf32, #tpu.memory_space<vmem>>, vector<1x128xf32>
      %367 = vector.shape_cast %366 : vector<1x128xf32> to vector<1x1x128xf32>
      %368 = vector.broadcast %367 : vector<1x1x128xf32> to vector<4x8x128xf32>
      %369 = arith.addf %365, %368 : vector<4x8x128xf32>
      %370 = arith.truncf %369 : vector<4x8x128xf32> to vector<4x8x128xbf16>
      %c0_67 = arith.constant 0 : index
      %c0_68 = arith.constant 0 : index
      %c0_69 = arith.constant 0 : index
      %c0_70 = arith.constant 0 : index
      %371 = vector.load %arg7[%c0_67, %c0_68, %c0_69, %c0_70] : memref<1x4x8x128xbf16, #tpu.memory_space<vmem>>, vector<1x4x8x128xbf16>
      %372 = vector.shape_cast %371 : vector<1x4x8x128xbf16> to vector<4x8x128xbf16>
      %373 = vector.shape_cast %370 : vector<4x8x128xbf16> to vector<1x4x8x128xbf16>
      tpu.vector_store %arg7[%c0_67, %c0_68, %c0_69, %c0_70], %373 {strides = array<i32>} : memref<1x4x8x128xbf16, #tpu.memory_space<vmem>>, vector<1x4x8x128xbf16>,
    } else {
    }
    return
  }
  func.func @transform_0(%arg0: i32, %arg1: i32) -> (i32, i32, i32) {
    %c1_i32 = arith.constant 1 : i32
    %0 = arith.minsi %arg1, %c1_i32 : i32
    %c0_i32 = arith.constant 0 : i32
    %c0_i32_0 = arith.constant 0 : i32
    return %arg0, %0, %c0_i32 : i32, i32, i32
  }
  func.func @transform_1(%arg0: i32, %arg1: i32) -> (i32, i32) {
    %c0_i32 = arith.constant 0 : i32
    %c0_i32_0 = arith.constant 0 : i32
    %c0_i32_1 = arith.constant 0 : i32
    return %c0_i32, %c0_i32_0 : i32, i32
  }
  func.func @transform_2(%arg0: i32, %arg1: i32) -> (i32, i32) {
    %c0_i32 = arith.constant 0 : i32
    %c0_i32_0 = arith.constant 0 : i32
    %c0_i32_1 = arith.constant 0 : i32
    return %c0_i32, %c0_i32_0 : i32, i32
  }
  func.func @transform_3(%arg0: i32, %arg1: i32) -> (i32, i32) {
    %c0_i32 = arith.constant 0 : i32
    %c0_i32_0 = arith.constant 0 : i32
    %c0_i32_1 = arith.constant 0 : i32
    return %c0_i32, %c0_i32_0 : i32, i32
  }
  func.func @transform_4(%arg0: i32, %arg1: i32) -> (i32, i32) {
    %c0_i32 = arith.constant 0 : i32
    %c0_i32_0 = arith.constant 0 : i32
    %c0_i32_1 = arith.constant 0 : i32
    return %c0_i32, %c0_i32_0 : i32, i32
  }
  func.func @transform_5(%arg0: i32, %arg1: i32) -> (i32, i32, i32, i32) {
    %c1_i32 = arith.constant 1 : i32
    %0 = arith.subi %arg1, %c1_i32 : i32
    %c0_i32 = arith.constant 0 : i32
    %1 = arith.maxsi %0, %c0_i32 : i32
    %c0_i32_0 = arith.constant 0 : i32
    %c0_i32_1 = arith.constant 0 : i32
    %c0_i32_2 = arith.constant 0 : i32
    return %arg0, %1, %c0_i32_0, %c0_i32_1 : i32, i32, i32, i32
  }
}

</mosaic_0001>

<llo_original>
// kernel: tpu_custom_call.1
$region0: #{tpu_custom_call.1}
  #allocation0 [shape = 'u32[]', space=smem, size = 0x4, offset = 0x4, fixed_abs, tag = 'smem constant byte address 0x4 - core index']
  #allocation1 [shape = 'u32[144,128]{1,0:T(1,128)}', space=vmem, size = 0x12000, scoped, tag = 'internal scratch']
  #allocation2 [shape = 'f32[4,16,128]{2,1,0:T(8,128)}', space=vmem, size = 0x8000, scoped, tag = 'scratch operand']
  #allocation3 [shape = 'f32[14,19,128]{2,1,0:T(8,128)}', space=vmem, size = 0x2a000, scoped, tag = 'scratch operand']
  %s0 = inlined_call_operand.hbm [shape: bf16[2,256,128], index: 0, kind: input, shape index: {}]
  %s1 = inlined_call_operand.hbm [shape: bf16[128,128], index: 1, kind: input, shape index: {}]
  %s2 = inlined_call_operand.hbm [shape: f32[1,128], index: 2, kind: input, shape index: {}]
  %s3 = inlined_call_operand.hbm [shape: f32[49,128], index: 3, kind: input, shape index: {}]
  %s4 = inlined_call_operand.hbm [shape: f32[1,128], index: 4, kind: input, shape index: {}]
  %s5 = inlined_call_operand.hbm [shape: bf16[2,8,8,128], index: 5, kind: output, shape index: {}]
  %s6 = sld [smem:[#allocation0]]
  $region85: #{tpu_custom_call.1} parent=0
    _
  %s8 = ssub.s32 1, %s6
  %s9 = scalar_select 0, %s8, %s6
  $region1: #{tpu_custom_call.1} parent=0
    #allocation4 [shape = 'u8[65536]{0}', space=vmem, size = 0x10000, scoped, tag = 'input window, operand 0']
    #allocation5 [shape = 's32[2]{0}', space=sflag, size = 0x8, scoped, tag = 'scoped memory for tpu_custom_call.1']
    #allocation6 [shape = 's32[2]{0}', space=sflag, size = 0x8, scoped, tag = 'scoped memory for tpu_custom_call.1']
    #allocation7 [shape = 'u8[32768]{0}', space=vmem, size = 0x8000, scoped, tag = 'input window, operand 1, single buffered']
    #allocation8 [shape = 's32[1]{0}', space=sflag, size = 0x4, scoped, tag = 'scoped memory for tpu_custom_call.1']
    #allocation9 [shape = 'u8[512]{0}', space=vmem, size = 0x400, scoped, tag = 'input window, operand 2, single buffered']
    #allocation10 [shape = 'u8[28672]{0}', space=vmem, size = 0x7000, scoped, tag = 'input window, operand 3, single buffered']
    #allocation11 [shape = 's32[1]{0}', space=sflag, size = 0x4, scoped, tag = 'scoped memory for tpu_custom_call.1']
    #allocation12 [shape = 'u8[512]{0}', space=vmem, size = 0x400, scoped, tag = 'input window, operand 4, single buffered']
    #allocation13 [shape = 'u8[16384]{0}', space=vmem, size = 0x4000, scoped, tag = 'output window, operand 0']
    %10 = vsyncpa [#allocation5], 0
    %s11 = scalar_lea.sflag [#allocation5], 1
    %12 = vsyncpa %s11, 0
    %13 = vsyncpa [#allocation8], 0
    %14 = vsyncpa [#allocation11], 0
    %15 = vsyncpa [#allocation6], 0
    %s16 = scalar_lea.sflag [#allocation6], 1
    %17 = vsyncpa %s16, 0
    loop: start=0, step=1, limit=8
    $region2: #{tpu_custom_call.1} parent=1 // loop_pre_header
      _
    $region3: #{tpu_custom_call.1} parent=1 // loop_header
      %s19 = sphi 0, %s23
      %p20 = scmp.ge.s32.totalorder %s19, 8
      %s26 = sphi 0, %s38
      %s27 = sphi 0, %s34
      %s28 = sphi 0, %s26
      %s29 = sphi 0, %s27
      %s30 = sphi 0, %s28
      %s31 = sphi 0, %s29
      %s47 = sphi 0, %s49
      %s50 = sphi 0, %s47
      %s51 = sphi 0, %s50
      %s67 = sphi 0, %s51
      %s71 = sphi 0, %s71
      %s73 = sphi 0, %s71
      %s74 = sphi 0, %s73
      %s88 = sphi 0, %s74
      %s92 = sphi 0, %s92
      %s94 = sphi 0, %s92
      %s95 = sphi 0, %s94
      %s109 = sphi 0, %s95
      %s113 = sphi 0, %s113
      %s115 = sphi 0, %s113
      %s116 = sphi 0, %s115
      %s130 = sphi 0, %s116
      %s134 = sphi 0, %s134
      %s136 = sphi 0, %s134
      %s137 = sphi 0, %s136
      %s151 = sphi 0, %s137
      %s165 = sphi 0, %s167
      %s168 = sphi 0, %s165
      %s169 = sphi 0, %s168
      %s185 = sphi 0, %s169
    $region4: #{tpu_custom_call.1} parent=1 // loop_header_branch
      %22 = sbr.rel (%p20) target = $region8
    $region5: #{tpu_custom_call.1} parent=1 // loop_body
      %s24 = ssub.s32 %s19, 1
      %s25 = ssub.s32 %s19, 2
      %s32 = sadd.s32 1, %s27
      %p33 = scmp.ge.s32.totalorder %s32, 3
      %s34 = scalar_select %p33, 0, %s32
      %s35 = sadd.s32 1, %s26
      %s36 = scalar_select %p33, %s35, %s26
      %p37 = scmp.ge.s32.totalorder %s36, 2
      %s38 = scalar_select %p37, 0, %s36
      %p39 = scmp.lt.s32.totalorder %s27, 1
      %s40 = scalar_select %p39, %s27, 1
      %p41 = scmp.lt.s32.totalorder %s34, 1
      %s42 = scalar_select %p41, %s34, 1
      %s43 = ssub.s32 %s26, %s38
      %s44 = ssub.s32 %s40, %s42
      %s45 = sor.u32 %s43, %s44
      %p46 = scmp.eq.s32.totalorder %s45, 0
      %s48 = sadd.s32 %s47, 1
      %s49 = scalar_select %p46, %s47, %s48
      %p52 = pneg %p46
      %p53 = scmp.eq.s32.totalorder %s19, 5
      %p54 = por %p52, %p53
      %p55 = scmp.ne.s32.totalorder %s47, %s50
      %p56 = scmp.eq.s32.totalorder %s19, 0
      %p57 = por %p55, %p56
      %p58 = scmp.ne.s32.totalorder %s47, %s50
      %p59 = scmp.eq.s32.totalorder %s24, 5
      %p60 = por %p58, %p59
      %p61 = scmp.ne.s32.totalorder %s50, %s51
      %p62 = scmp.eq.s32.totalorder %s24, 0
      %p63 = por %p61, %p62
      %p64 = scmp.ne.s32.totalorder %s50, %s51
      %p65 = scmp.eq.s32.totalorder %s25, 5
      %p66 = por %p64, %p65
      %p68 = scmp.ne.s32.totalorder %s51, %s67
      %p69 = scmp.eq.s32.totalorder %s25, 0
      %p70 = por %p68, %p69
      %s72 = sadd.s32 %s71, 1
      %p75 = scmp.eq.s32.totalorder %s19, 5
      %p76 = scmp.ne.s32.totalorder %s71, %s73
      %p77 = scmp.eq.s32.totalorder %s19, 0
      %p78 = por %p76, %p77
      %p79 = scmp.ne.s32.totalorder %s71, %s73
      %p80 = scmp.eq.s32.totalorder %s24, 5
      %p81 = por %p79, %p80
      %p82 = scmp.ne.s32.totalorder %s73, %s74
      %p83 = scmp.eq.s32.totalorder %s24, 0
      %p84 = por %p82, %p83
      %p85 = scmp.ne.s32.totalorder %s73, %s74
      %p86 = scmp.eq.s32.totalorder %s25, 5
      %p87 = por %p85, %p86
      %p89 = scmp.ne.s32.totalorder %s74, %s88
      %p90 = scmp.eq.s32.totalorder %s25, 0
      %p91 = por %p89, %p90
      %s93 = sadd.s32 %s92, 1
      %p96 = scmp.eq.s32.totalorder %s19, 5
      %p97 = scmp.ne.s32.totalorder %s92, %s94
      %p98 = scmp.eq.s32.totalorder %s19, 0
      %p99 = por %p97, %p98
      %p100 = scmp.ne.s32.totalorder %s92, %s94
      %p101 = scmp.eq.s32.totalorder %s24, 5
      %p102 = por %p100, %p101
      %p103 = scmp.ne.s32.totalorder %s94, %s95
      %p104 = scmp.eq.s32.totalorder %s24, 0
      %p105 = por %p103, %p104
      %p106 = scmp.ne.s32.totalorder %s94, %s95
      %p107 = scmp.eq.s32.totalorder %s25, 5
      %p108 = por %p106, %p107
      %p110 = scmp.ne.s32.totalorder %s95, %s109
      %p111 = scmp.eq.s32.totalorder %s25, 0
      %p112 = por %p110, %p111
      %s114 = sadd.s32 %s113, 1
      %p117 = scmp.eq.s32.totalorder %s19, 5
      %p118 = scmp.ne.s32.totalorder %s113, %s115
      %p119 = scmp.eq.s32.totalorder %s19, 0
      %p120 = por %p118, %p119
      %p121 = scmp.ne.s32.totalorder %s113, %s115
      %p122 = scmp.eq.s32.totalorder %s24, 5
      %p123 = por %p121, %p122
      %p124 = scmp.ne.s32.totalorder %s115, %s116
      %p125 = scmp.eq.s32.totalorder %s24, 0
      %p126 = por %p124, %p125
      %p127 = scmp.ne.s32.totalorder %s115, %s116
      %p128 = scmp.eq.s32.totalorder %s25, 5
      %p129 = por %p127, %p128
      %p131 = scmp.ne.s32.totalorder %s116, %s130
      %p132 = scmp.eq.s32.totalorder %s25, 0
      %p133 = por %p131, %p132
      %s135 = sadd.s32 %s134, 1
      %p138 = scmp.eq.s32.totalorder %s19, 5
      %p139 = scmp.ne.s32.totalorder %s134, %s136
      %p140 = scmp.eq.s32.totalorder %s19, 0
      %p141 = por %p139, %p140
      %p142 = scmp.ne.s32.totalorder %s134, %s136
      %p143 = scmp.eq.s32.totalorder %s24, 5
      %p144 = por %p142, %p143
      %p145 = scmp.ne.s32.totalorder %s136, %s137
      %p146 = scmp.eq.s32.totalorder %s24, 0
      %p147 = por %p145, %p146
      %p148 = scmp.ne.s32.totalorder %s136, %s137
      %p149 = scmp.eq.s32.totalorder %s25, 5
      %p150 = por %p148, %p149
      %p152 = scmp.ne.s32.totalorder %s137, %s151
      %p153 = scmp.eq.s32.totalorder %s25, 0
      %p154 = por %p152, %p153
      %s155 = ssub.s32 %s27, 1
      %p156 = scmp.gt.s32.totalorder %s155, 0
      %s157 = scalar_select %p156, %s155, 0
      %s158 = ssub.s32 %s34, 1
      %p159 = scmp.gt.s32.totalorder %s158, 0
      %s160 = scalar_select %p159, %s158, 0
      %s161 = ssub.s32 %s26, %s38
      %s162 = ssub.s32 %s157, %s160
      %s163 = sor.u32 %s161, %s162
      %p164 = scmp.eq.s32.totalorder %s163, 0
      %s166 = sadd.s32 %s165, 1
      %s167 = scalar_select %p164, %s165, %s166
      %p170 = pneg %p164
      %p171 = scmp.eq.s32.totalorder %s19, 5
      %p172 = por %p170, %p171
      %p173 = scmp.ne.s32.totalorder %s165, %s168
      %p174 = scmp.eq.s32.totalorder %s19, 0
      %p175 = por %p173, %p174
      %p176 = scmp.ne.s32.totalorder %s165, %s168
      %p177 = scmp.eq.s32.totalorder %s24, 5
      %p178 = por %p176, %p177
      %p179 = scmp.ne.s32.totalorder %s168, %s169
      %p180 = scmp.eq.s32.totalorder %s24, 0
      %p181 = por %p179, %p180
      %p182 = scmp.ne.s32.totalorder %s168, %s169
      %p183 = scmp.eq.s32.totalorder %s25, 5
      %p184 = por %p182, %p183
      %p186 = scmp.ne.s32.totalorder %s169, %s185
      %p187 = scmp.eq.s32.totalorder %s25, 0
      %p188 = por %p186, %p187
      %p189 = scmp.le.s32.totalorder 1, %s19
      %p190 = scmp.lt.s32.totalorder %s19, 7
      %p191 = pnand %p189, %p190
      %p192 = pneg %p191
      // Predicated region
      $region9: #{tpu_custom_call.1} parent=5 // pred_check
        _
      $region10: #{tpu_custom_call.1} parent=5 // pred_check_branch
        %194 = sbr.rel (%p191) target = $region12
      $region11: #{tpu_custom_call.1} parent=5 // pred_region
        %s195 = ssub.s32 %s19, 1
        // Predicated region
        $region13: #{tpu_custom_call.1} parent=11 // pred_check
          %p196 = pneg %p84
        $region14: #{tpu_custom_call.1} parent=11 // pred_check_branch
          %198 = sbr.rel (%p196) target = $region16
        $region15: #{tpu_custom_call.1} parent=11 // pred_region
          %s200 = ssub.s32 1024, 1024
          %201 = vsyncadd [#allocation8], %s200
          %s202 = sshll.u32 [#allocation7], 4
          %s203 = int_to_ptr.vmem [resolvable:$true] %s202
          %208 = dma.hbm_to_vmem [thread:$0]  %s1, 1024, %s203, [#allocation8], 64, 64, 4
        $region16: #{tpu_custom_call.1} parent=11 // pred_fallthru
          _
        // Predicated region
        $region17: #{tpu_custom_call.1} parent=11 // pred_check
          %p209 = pneg %p105
        $region18: #{tpu_custom_call.1} parent=11 // pred_check_branch
          %211 = sbr.rel (%p209) target = $region20
        $region19: #{tpu_custom_call.1} parent=11 // pred_region
          %s213 = ssub.s32 16, 16
          %214 = vsyncadd [#allocation8], %s213
          %s216 = sshll.u32 [#allocation9], 4
          %s217 = int_to_ptr.vmem [resolvable:$true] %s216
          %219 = dma.hbm_to_vmem [thread:$0]  %s2, 16, %s217, [#allocation8]
        $region20: #{tpu_custom_call.1} parent=11 // pred_fallthru
          _
        // Predicated region
        $region21: #{tpu_custom_call.1} parent=11 // pred_check
          %p220 = pneg %p126
        $region22: #{tpu_custom_call.1} parent=11 // pred_check_branch
          %222 = sbr.rel (%p220) target = $region24
        $region23: #{tpu_custom_call.1} parent=11 // pred_region
          %s224 = ssub.s32 896, 896
          %225 = vsyncadd [#allocation11], %s224
          %s226 = sshll.u32 [#allocation10], 4
          %s227 = int_to_ptr.vmem [resolvable:$true] %s226
          %232 = dma.hbm_to_vmem [thread:$0]  %s3, 896, %s227, [#allocation11], 128, 128, 8
        $region24: #{tpu_custom_call.1} parent=11 // pred_fallthru
          _
        // Predicated region
        $region25: #{tpu_custom_call.1} parent=11 // pred_check
          %p233 = pneg %p147
        $region26: #{tpu_custom_call.1} parent=11 // pred_check_branch
          %235 = sbr.rel (%p233) target = $region28
        $region27: #{tpu_custom_call.1} parent=11 // pred_region
          %s237 = ssub.s32 16, 16
          %238 = vsyncadd [#allocation11], %s237
          %s240 = sshll.u32 [#allocation12], 4
          %s241 = int_to_ptr.vmem [resolvable:$true] %s240
          %243 = dma.hbm_to_vmem [thread:$0]  %s4, 16, %s241, [#allocation11]
        $region28: #{tpu_custom_call.1} parent=11 // pred_fallthru
          _
      $region12: #{tpu_custom_call.1} parent=5 // pred_fallthru
        _
      %p244 = scmp.lt.s32.totalorder %s19, 6
      // Predicated region
      $region29: #{tpu_custom_call.1} parent=5 // pred_check
        %p245 = pneg %p244
      $region30: #{tpu_custom_call.1} parent=5 // pred_check_branch
        %247 = sbr.rel (%p245) target = $region32
      $region31: #{tpu_custom_call.1} parent=5 // pred_region
        // Predicated region
        $region33: #{tpu_custom_call.1} parent=31 // pred_check
          %p248 = pneg %p57
        $region34: #{tpu_custom_call.1} parent=31 // pred_check_branch
          %250 = sbr.rel (%p248) target = $region36
        $region35: #{tpu_custom_call.1} parent=31 // pred_region
          %s251 = sand.u32 %s47, 1
          %s252 = scalar_lea.sflag [#allocation5], %s251
          %s253 = sand.u32 %s47, 1
          %s254 = smul.addr %s253, 64
          %s255 = scalar_lea.vmem [#allocation4], %s254
          %p256 = scmp.lt.s32.totalorder %s27, 1
          %s257 = scalar_select %p256, %s27, 1
          %s258 = smul.u32 16, %s257
          %s260 = ssub.s32 1024, 1024
          %261 = vsyncadd %s252, %s260
          %s262 = smul.addr %s26, 32
          %s263 = sadd.s32 %s258, %s262
          %s264 = smul.addr %s263, 64
          %s265 = scalar_lea.hbm %s0, %s264
          %s266 = sshll.u32 %s255, 4
          %s267 = int_to_ptr.vmem [resolvable:$true] %s266
          %272 = dma.hbm_to_vmem [thread:$0]  %s265, 1024, %s267, %s252, 64, 64, 4
        $region36: #{tpu_custom_call.1} parent=31 // pred_fallthru
          _
      $region32: #{tpu_custom_call.1} parent=5 // pred_fallthru
        _
      %p273 = scmp.le.s32.totalorder 1, %s19
      %p274 = scmp.lt.s32.totalorder %s19, 7
      %p275 = pnand %p273, %p274
      %p276 = pneg %p275
      // Predicated region
      $region37: #{tpu_custom_call.1} parent=5 // pred_check
        _
      $region38: #{tpu_custom_call.1} parent=5 // pred_check_branch
        %278 = sbr.rel (%p275) target = $region40
      $region39: #{tpu_custom_call.1} parent=5 // pred_region
        %s279 = ssub.s32 %s19, 1
        %s280 = sand.u32 %s50, 1
        %s281 = scalar_lea.sflag [#allocation5], %s280
        %s282 = sand.u32 %s50, 1
        %s283 = smul.addr %s282, 64
        %s284 = scalar_lea.vmem [#allocation4], %s283
        // Predicated region
        $region41: #{tpu_custom_call.1} parent=39 // pred_check
          %p285 = pneg %p63
        $region42: #{tpu_custom_call.1} parent=39 // pred_check_branch
          %287 = sbr.rel (%p285) target = $region44
        $region43: #{tpu_custom_call.1} parent=39 // pred_region
          %288 = dma.done %s281, 1024
        $region44: #{tpu_custom_call.1} parent=39 // pred_fallthru
          _
        // Predicated region
        $region45: #{tpu_custom_call.1} parent=39 // pred_check
          %p289 = pneg %p84
        $region46: #{tpu_custom_call.1} parent=39 // pred_check_branch
          %291 = sbr.rel (%p289) target = $region48
        $region47: #{tpu_custom_call.1} parent=39 // pred_region
          %292 = dma.done [#allocation8], 1024
        $region48: #{tpu_custom_call.1} parent=39 // pred_fallthru
          _
        // Predicated region
        $region49: #{tpu_custom_call.1} parent=39 // pred_check
          %p293 = pneg %p105
        $region50: #{tpu_custom_call.1} parent=39 // pred_check_branch
          %295 = sbr.rel (%p293) target = $region52
        $region51: #{tpu_custom_call.1} parent=39 // pred_region
          %296 = dma.done [#allocation8], 16
        $region52: #{tpu_custom_call.1} parent=39 // pred_fallthru
          _
        // Predicated region
        $region53: #{tpu_custom_call.1} parent=39 // pred_check
          %p297 = pneg %p126
        $region54: #{tpu_custom_call.1} parent=39 // pred_check_branch
          %299 = sbr.rel (%p297) target = $region56
        $region55: #{tpu_custom_call.1} parent=39 // pred_region
          %300 = dma.done [#allocation11], 896
        $region56: #{tpu_custom_call.1} parent=39 // pred_fallthru
          _
        // Predicated region
        $region57: #{tpu_custom_call.1} parent=39 // pred_check
          %p301 = pneg %p147
        $region58: #{tpu_custom_call.1} parent=39 // pred_check_branch
          %303 = sbr.rel (%p301) target = $region60
        $region59: #{tpu_custom_call.1} parent=39 // pred_region
          %304 = dma.done [#allocation11], 16
        $region60: #{tpu_custom_call.1} parent=39 // pred_fallthru
          _
        %s305 = sand.u32 %s50, 1
        %s306 = scalar_lea.sflag [#allocation5], %s305
        %s307 = sand.u32 %s50, 1
        %s308 = smul.addr %s307, 64
        %s309 = scalar_lea.vmem [#allocation4], %s308
        %p310 = pneg %p63
        %p311 = pneg %p60
        %p312 = pneg %p84
        %p313 = pneg %p81
        %p314 = pneg %p105
        %p315 = pneg %p102
        %p316 = pneg %p126
        %p317 = pneg %p123
        %p318 = pneg %p147
        %p319 = pneg %p144
        %p320 = pneg %p181
        %p321 = pneg %p178
        %s322 = sand.u32 %s168, 1
        %s323 = scalar_lea.sflag [#allocation6], %s322
        %s324 = sand.u32 %s168, 1
        %s325 = smul.addr %s324, 16
        %s326 = scalar_lea.vmem [#allocation13], %s325
        %p327 = scmp.lt.s32.totalorder %s29, 1
        %s328 = scalar_select %p327, %s29, 1
        %s329 = smul.u32 16, %s328
        %s330 = ssub.s32 %s29, 1
        %p331 = scmp.gt.s32.totalorder %s330, 0
        %s332 = scalar_select %p331, %s330, 0
        %s333 = smul.u32 4, %s332
        %p335 = scmp.lt.s32.totalorder %s29, 2
        // Predicated region
        $region61: #{tpu_custom_call.1} parent=39 // pred_check
          %p336 = pneg %p335
        $region62: #{tpu_custom_call.1} parent=39 // pred_check_branch
          %338 = sbr.rel (%p336) target = $region64
        $region63: #{tpu_custom_call.1} parent=39 // pred_region
          %v339 = vld [vmem:[%s284] sm:$0xf]
          %v340 = vld [vmem:[%s284 + $0x4] sm:$0xf]
          %v341 = vld [vmem:[%s284 + $0x8] sm:$0xf]
          %v342 = vld [vmem:[%s284 + $0xc] sm:$0xf]
          %v343 = vld [vmem:[%s284 + $0x10] sm:$0xf]
          %v344 = vld [vmem:[%s284 + $0x14] sm:$0xf]
          %v345 = vld [vmem:[%s284 + $0x18] sm:$0xf]
          %v346 = vld [vmem:[%s284 + $0x1c] sm:$0xf]
          %v347 = vld [vmem:[%s284 + $0x20] sm:$0xf]
          %v348 = vld [vmem:[%s284 + $0x24] sm:$0xf]
          %v349 = vld [vmem:[%s284 + $0x28] sm:$0xf]
          %v350 = vld [vmem:[%s284 + $0x2c] sm:$0xf]
          %v351 = vld [vmem:[%s284 + $0x30] sm:$0xf]
          %v352 = vld [vmem:[%s284 + $0x34] sm:$0xf]
          %v353 = vld [vmem:[%s284 + $0x38] sm:$0xf]
          %v354 = vld [vmem:[%s284 + $0x3c] sm:$0xf]
          %v355 = vld [vmem:[#allocation7] sm:$0xf]
          %v356 = vld [vmem:[#allocation7 + $0x4] sm:$0xf]
          %v357 = vld [vmem:[#allocation7 + $0x8] sm:$0xf]
          %v358 = vld [vmem:[#allocation7 + $0xc] sm:$0xf]
          %v359 = vld [vmem:[#allocation7 + $0x10] sm:$0xf]
          %v360 = vld [vmem:[#allocation7 + $0x14] sm:$0xf]
          %v361 = vld [vmem:[#allocation7 + $0x18] sm:$0xf]
          %v362 = vld [vmem:[#allocation7 + $0x1c] sm:$0xf]
          %v363 = vld [vmem:[#allocation7 + $0x20] sm:$0xf]
          %v364 = vld [vmem:[#allocation7 + $0x24] sm:$0xf]
          %v365 = vld [vmem:[#allocation7 + $0x28] sm:$0xf]
          %v366 = vld [vmem:[#allocation7 + $0x2c] sm:$0xf]
          %v367 = vld [vmem:[#allocation7 + $0x30] sm:$0xf]
          %v368 = vld [vmem:[#allocation7 + $0x34] sm:$0xf]
          %v369 = vld [vmem:[#allocation7 + $0x38] sm:$0xf]
          %v370 = vld [vmem:[#allocation7 + $0x3c] sm:$0xf]
          %v371 = vld [vmem:[#allocation9] sm:$0x1]
          %v373 = vlaneseq
          %v374 = vshrl.u32 %v373, 7
          %v375 = vsub.s32 0, %v374
          %v376 = vrot.slane %v371, %v375
          %v394 = vunpack.c.l.b16 %v339
          %v395 = vunpack.c.l.b16 %v340
          %v396 = vunpack.c.l.b16 %v341
          %v397 = vunpack.c.l.b16 %v342
          %v398 = vunpack.c.l.b16 %v343
          %v399 = vunpack.c.l.b16 %v344
          %v400 = vunpack.c.l.b16 %v345
          %v401 = vunpack.c.l.b16 %v346
          %v402 = vunpack.c.l.b16 %v347
          %v403 = vunpack.c.l.b16 %v348
          %v404 = vunpack.c.l.b16 %v349
          %v405 = vunpack.c.l.b16 %v350
          %v406 = vunpack.c.l.b16 %v351
          %v407 = vunpack.c.l.b16 %v352
          %v408 = vunpack.c.l.b16 %v353
          %v409 = vunpack.c.l.b16 %v354
          %v410 = vpack.c.b16 %v395, %v394
          %v411 = vpack.c.b16 %v397, %v396
          %v412 = vpack.c.b16 %v399, %v398
          %v413 = vpack.c.b16 %v401, %v400
          %v414 = vpack.c.b16 %v403, %v402
          %v415 = vpack.c.b16 %v405, %v404
          %v416 = vpack.c.b16 %v407, %v406
          %v417 = vpack.c.b16 %v409, %v408
          %v442 = vunpack.c.l.b16 %v355
          %v443 = vunpack.c.l.b16 %v356
          %v444 = vunpack.c.l.b16 %v357
          %v445 = vunpack.c.l.b16 %v358
          %v446 = vunpack.c.l.b16 %v359
          %v447 = vunpack.c.l.b16 %v360
          %v448 = vunpack.c.l.b16 %v361
          %v449 = vunpack.c.l.b16 %v362
          %v450 = vunpack.c.l.b16 %v363
          %v451 = vunpack.c.l.b16 %v364
          %v452 = vunpack.c.l.b16 %v365
          %v453 = vunpack.c.l.b16 %v366
          %v454 = vunpack.c.l.b16 %v367
          %v455 = vunpack.c.l.b16 %v368
          %v456 = vunpack.c.l.b16 %v369
          %v457 = vunpack.c.l.b16 %v370
          %v458 = vpack.c.b16 %v443, %v442
          %v459 = vpack.c.b16 %v445, %v444
          %v460 = vpack.c.b16 %v447, %v446
          %v461 = vpack.c.b16 %v449, %v448
          %v462 = vpack.c.b16 %v451, %v450
          %v463 = vpack.c.b16 %v453, %v452
          %v464 = vpack.c.b16 %v455, %v454
          %v465 = vpack.c.b16 %v457, %v456
          %474 = vmatprep.subr.bf16.mxu0 0
          %475 = vmatpush1.bf16.msra.mxu0 %v458
          %476 = vmatprep.subr.bf16.mxu0 0
          %477 = vmatpush1.bf16.msra.mxu0 %v459
          %478 = vmatprep.subr.bf16.mxu0 0
          %479 = vmatpush1.bf16.msra.mxu0 %v460
          %480 = vmatprep.subr.bf16.mxu0 0
          %481 = vmatpush1.bf16.msra.mxu0 %v461
          %482 = vmatprep.subr.bf16.mxu0 0
          %483 = vmatpush1.bf16.msra.mxu0 %v462
          %484 = vmatprep.subr.bf16.mxu0 0
          %485 = vmatpush1.bf16.msra.mxu0 %v463
          %486 = vmatprep.subr.bf16.mxu0 0
          %487 = vmatpush1.bf16.msra.mxu0 %v464
          %488 = vmatprep.subr.bf16.mxu0 0
          %489 = vmatpush1.bf16.msra.mxu0 %v465
          %490 = vmatprep.subr.bf16.mxu0 0
          %491 = vmatpush1.bf16.msra.mxu0 0
          %492 = vmatprep.subr.bf16.mxu0 0
          %493 = vmatpush1.bf16.msra.mxu0 0
          %494 = vmatprep.subr.bf16.mxu0 0
          %495 = vmatpush1.bf16.msra.mxu0 0
          %496 = vmatprep.subr.bf16.mxu0 0
          %497 = vmatpush1.bf16.msra.mxu0 0
          %498 = vmatprep.subr.bf16.mxu0 0
          %499 = vmatpush1.bf16.msra.mxu0 0
          %500 = vmatprep.subr.bf16.mxu0 0
          %501 = vmatpush1.bf16.msra.mxu0 0
          %502 = vmatprep.subr.bf16.mxu0 0
          %503 = vmatpush1.bf16.msra.mxu0 0
          %504 = vmatprep.subr.bf16.mxu0 0
          %505 = vmatpush1.bf16.msra.mxu0 0
          %506 = vmatprep.mubr.bf16.mxu0 0
          %507 = vmatmul.mubr.bf16.gmra.mrb[0].mxu0 %v410
          %v508 = vpop.f32.mrb[0].mxu0
          %v509 = vadd.f32 %v376, %v508
          %v510 = vpop.f32.mrb[0].mxu0
          %v511 = vpop.f32.mrb[0].mxu0
          %v512 = vadd.f32 %v376, %v511
          %v513 = vpop.f32.mrb[0].mxu0
          %514 = vmatprep.mubr.bf16.mxu0 0
          %515 = vmatmul.mubr.bf16.gmra.mrb[0].mxu0 %v411
          %v516 = vpop.f32.mrb[0].mxu0
          %v517 = vadd.f32 %v376, %v516
          %v518 = vpop.f32.mrb[0].mxu0
          %v519 = vpop.f32.mrb[0].mxu0
          %v520 = vadd.f32 %v376, %v519
          %v521 = vpop.f32.mrb[0].mxu0
          %522 = vmatprep.mubr.bf16.mxu0 0
          %523 = vmatmul.mubr.bf16.gmra.mrb[0].mxu0 %v412
          %v524 = vpop.f32.mrb[0].mxu0
          %v525 = vadd.f32 %v376, %v524
          %v526 = vpop.f32.mrb[0].mxu0
          %v527 = vpop.f32.mrb[0].mxu0
          %v528 = vadd.f32 %v376, %v527
          %v529 = vpop.f32.mrb[0].mxu0
          %530 = vmatprep.mubr.bf16.mxu0 0
          %531 = vmatmul.mubr.bf16.gmra.mrb[0].mxu0 %v413
          %v532 = vpop.f32.mrb[0].mxu0
          %v533 = vadd.f32 %v376, %v532
          %v534 = vpop.f32.mrb[0].mxu0
          %v535 = vpop.f32.mrb[0].mxu0
          %v536 = vadd.f32 %v376, %v535
          %v537 = vpop.f32.mrb[0].mxu0
          %538 = vmatprep.mubr.bf16.mxu0 0
          %539 = vmatmul.mubr.bf16.gmra.mrb[0].mxu0 %v414
          %v540 = vpop.f32.mrb[0].mxu0
          %v541 = vadd.f32 %v376, %v540
          %v542 = vpop.f32.mrb[0].mxu0
          %v543 = vpop.f32.mrb[0].mxu0
          %v544 = vadd.f32 %v376, %v543
          %v545 = vpop.f32.mrb[0].mxu0
          %546 = vmatprep.mubr.bf16.mxu0 0
          %547 = vmatmul.mubr.bf16.gmra.mrb[0].mxu0 %v415
          %v548 = vpop.f32.mrb[0].mxu0
          %v549 = vadd.f32 %v376, %v548
          %v550 = vpop.f32.mrb[0].mxu0
          %v551 = vpop.f32.mrb[0].mxu0
          %v552 = vadd.f32 %v376, %v551
          %v553 = vpop.f32.mrb[0].mxu0
          %554 = vmatprep.mubr.bf16.mxu0 0
          %555 = vmatmul.mubr.bf16.gmra.mrb[0].mxu0 %v416
          %v556 = vpop.f32.mrb[0].mxu0
          %v557 = vadd.f32 %v376, %v556
          %v558 = vpop.f32.mrb[0].mxu0
          %v559 = vpop.f32.mrb[0].mxu0
          %v560 = vadd.f32 %v376, %v559
          %v561 = vpop.f32.mrb[0].mxu0
          %562 = vmatprep.mubr.bf16.mxu0 0
          %563 = vmatmul.mubr.bf16.gmra.mrb[0].mxu0 %v417
          %v564 = vpop.f32.mrb[0].mxu0
          %v565 = vadd.f32 %v376, %v564
          %v566 = vpop.f32.mrb[0].mxu0
          %v567 = vpop.f32.mrb[0].mxu0
          %v568 = vadd.f32 %v376, %v567
          %v569 = vpop.f32.mrb[0].mxu0
          %570 = vdwg.mxu0
          %v571 = vmax.f32 %v509, %v517
          %v572 = vmax.f32 %v512, %v520
          %v573 = vmax.f32 %v525, %v533
          %v574 = vmax.f32 %v528, %v536
          %v575 = vmax.f32 %v541, %v549
          %v576 = vmax.f32 %v544, %v552
          %v577 = vmax.f32 %v557, %v565
          %v578 = vmax.f32 %v560, %v568
          %579 = vst [vmem:[#allocation2] sm:$0xff] %v571
          %580 = vst [vmem:[#allocation2 + $0x8] sm:$0xff] %v572
          %581 = vst [vmem:[#allocation2 + $0x10] sm:$0xff] %v573
          %582 = vst [vmem:[#allocation2 + $0x18] sm:$0xff] %v574
          %583 = vst [vmem:[#allocation2 + $0x20] sm:$0xff] %v575
          %584 = vst [vmem:[#allocation2 + $0x28] sm:$0xff] %v576
          %585 = vst [vmem:[#allocation2 + $0x30] sm:$0xff] %v577
          %586 = vst [vmem:[#allocation2 + $0x38] sm:$0xff] %v578
          %v587 = vld [vmem:[#allocation2] ss:$2 sm:$0xff]
          %s588 = scalar_lea.vmem [#allocation2], 16
          %v589 = vld [vmem:[%s588] ss:$2 sm:$0xff]
          %s590 = scalar_lea.vmem [#allocation2], 32
          %v591 = vld [vmem:[%s590] ss:$2 sm:$0xff]
          %s592 = scalar_lea.vmem [#allocation2], 48
          %v593 = vld [vmem:[%s592] ss:$2 sm:$0xff]
          %s594 = scalar_lea.vmem [#allocation2], 1
          %v595 = vld [vmem:[%s594] ss:$2 sm:$0xff]
          %s596 = scalar_lea.vmem [#allocation2], 17
          %v597 = vld [vmem:[%s596] ss:$2 sm:$0xff]
          %s598 = scalar_lea.vmem [#allocation2], 33
          %v599 = vld [vmem:[%s598] ss:$2 sm:$0xff]
          %s600 = scalar_lea.vmem [#allocation2], 49
          %v601 = vld [vmem:[%s600] ss:$2 sm:$0xff]
          %v602 = vmax.f32 %v587, %v595
          %v603 = vmax.f32 %v589, %v597
          %v604 = vmax.f32 %v591, %v599
          %v605 = vmax.f32 %v593, %v601
          %v606 = vmax.f32 %v602, 0.0
          %v607 = vmax.f32 %v603, 0.0
          %v608 = vmax.f32 %v604, 0.0
          %v609 = vmax.f32 %v605, 0.0
          %p610 = scmp.eq.s32.totalorder %s29, 0
          // Predicated region
          $region65: #{tpu_custom_call.1} parent=63 // pred_check
            %p611 = pneg %p610
          $region66: #{tpu_custom_call.1} parent=63 // pred_check_branch
            %613 = sbr.rel (%p611) target = $region68
          $region67: #{tpu_custom_call.1} parent=63 // pred_region
            %614 = vst [vmem:[#allocation3] sm:$0xff] 0.0
            %615 = vst [vmem:[#allocation3 + $0x8] sm:$0xff] 0.0
            %616 = vst [vmem:[#allocation3 + $0x10] sm:$0x7] 0.0
            %617 = vst [vmem:[#allocation3 + $0x18] sm:$0xff] 0.0
            %618 = vst [vmem:[#allocation3 + $0x20] sm:$0xff] 0.0
            %619 = vst [vmem:[#allocation3 + $0x28] sm:$0x7] 0.0
            %620 = vst [vmem:[#allocation3 + $0x30] sm:$0xff] 0.0
            %621 = vst [vmem:[#allocation3 + $0x38] sm:$0xff] 0.0
            %622 = vst [vmem:[#allocation3 + $0x40] sm:$0x7] 0.0
            %s623 = scalar_lea.vmem [#allocation3], 264
            %624 = vst [vmem:[%s623] sm:$0xff] 0.0
            %625 = vst [vmem:[%s623 + $0x8] sm:$0xff] 0.0
            %626 = vst [vmem:[%s623 + $0x10] sm:$0x7] 0.0
            %627 = vst [vmem:[%s623 + $0x18] sm:$0xff] 0.0
            %628 = vst [vmem:[%s623 + $0x20] sm:$0xff] 0.0
            %629 = vst [vmem:[%s623 + $0x28] sm:$0x7] 0.0
            %630 = vst [vmem:[%s623 + $0x30] sm:$0xff] 0.0
            %631 = vst [vmem:[%s623 + $0x38] sm:$0xff] 0.0
            %632 = vst [vmem:[%s623 + $0x40] sm:$0x7] 0.0
            %633 = vst [vmem:[#allocation3] sm:$0xff] 0.0
            %634 = vst [vmem:[#allocation3 + $0x18] sm:$0xff] 0.0
            %635 = vst [vmem:[#allocation3 + $0x30] sm:$0xff] 0.0
            %636 = vst [vmem:[#allocation3 + $0x48] sm:$0xff] 0.0
            %637 = vst [vmem:[#allocation3 + $0x60] sm:$0xff] 0.0
            %638 = vst [vmem:[#allocation3 + $0x78] sm:$0xff] 0.0
            %639 = vst [vmem:[#allocation3 + $0x90] sm:$0xff] 0.0
            %640 = vst [vmem:[#allocation3 + $0xa8] sm:$0xff] 0.0
            %641 = vst [vmem:[#allocation3 + $0xc0] sm:$0xff] 0.0
            %642 = vst [vmem:[#allocation3 + $0xd8] sm:$0xff] 0.0
            %643 = vst [vmem:[#allocation3 + $0xf0] sm:$0xff] 0.0
            %644 = vst [vmem:[#allocation3 + $0x108] sm:$0xff] 0.0
            %645 = vst [vmem:[#allocation3 + $0x120] sm:$0xff] 0.0
            %646 = vst [vmem:[#allocation3 + $0x138] sm:$0xff] 0.0
            %647 = vst [vmem:[#allocation3 + $0x10] sm:$0x7] 0.0
            %648 = vst [vmem:[#allocation3 + $0x28] sm:$0x7] 0.0
            %649 = vst [vmem:[#allocation3 + $0x40] sm:$0x7] 0.0
            %650 = vst [vmem:[#allocation3 + $0x58] sm:$0x7] 0.0
            %651 = vst [vmem:[#allocation3 + $0x70] sm:$0x7] 0.0
            %652 = vst [vmem:[#allocation3 + $0x88] sm:$0x7] 0.0
            %653 = vst [vmem:[#allocation3 + $0xa0] sm:$0x7] 0.0
            %654 = vst [vmem:[#allocation3 + $0xb8] sm:$0x7] 0.0
            %655 = vst [vmem:[#allocation3 + $0xd0] sm:$0x7] 0.0
            %656 = vst [vmem:[#allocation3 + $0xe8] sm:$0x7] 0.0
            %657 = vst [vmem:[#allocation3 + $0x100] sm:$0x7] 0.0
            %658 = vst [vmem:[#allocation3 + $0x118] sm:$0x7] 0.0
            %659 = vst [vmem:[#allocation3 + $0x130] sm:$0x7] 0.0
            %660 = vst [vmem:[#allocation3 + $0x148] sm:$0x7] 0.0
          $region68: #{tpu_custom_call.1} parent=63 // pred_fallthru
            _
          %s661 = smul.u32 %s29, 4
          %s662 = sadd.s32 %s661, 3
          %s663 = smul.u32 %s662, 24
          %s664 = scalar_lea.vmem [#allocation3], %s663
          %665 = vst [vmem:[%s664 + $0x8] sm:$0xff] %v606
          %666 = vst [vmem:[%s664 + $0x20] sm:$0xff] %v607
          %667 = vst [vmem:[%s664 + $0x38] sm:$0xff] %v608
          %668 = vst [vmem:[%s664 + $0x50] sm:$0xff] %v609
        $region64: #{tpu_custom_call.1} parent=39 // pred_fallthru
          _
        %p669 = scmp.ge.s32.totalorder %s29, 1
        // Predicated region
        $region69: #{tpu_custom_call.1} parent=39 // pred_check
          %p670 = pneg %p669
        $region70: #{tpu_custom_call.1} parent=39 // pred_check_branch
          %672 = sbr.rel (%p670) target = $region72
        $region71: #{tpu_custom_call.1} parent=39 // pred_region
          %s673 = ssub.s32 %s29, 1
          %s674 = smul.u32 %s673, 4
          %s675 = smul.u32 %s674, 24
          %s676 = scalar_lea.vmem [#allocation3], %s675
          %v677 = vld [vmem:[%s676 + $0x5] sm:$0xff]
          %v678 = vld [vmem:[%s676 + $0x1d] sm:$0xff]
          %v679 = vld [vmem:[%s676 + $0x35] sm:$0xff]
          %v680 = vld [vmem:[%s676 + $0x4d] sm:$0xff]
          %v681 = vld [vmem:[%s676 + $0x65] sm:$0xff]
          %v682 = vld [vmem:[%s676 + $0x7d] sm:$0xff]
          %v683 = vld [vmem:[%s676 + $0x95] sm:$0xff]
          %v684 = vld [vmem:[%s676 + $0xad] sm:$0xff]
          %v685 = vld [vmem:[%s676 + $0xc5] sm:$0xff]
          %v686 = vld [vmem:[%s676 + $0xdd] sm:$0xff]
          %v687 = vld [vmem:[#allocation10] sm:$0x1]
          %v688 = vlaneseq
          %v689 = vshrl.u32 %v688, 7
          %v690 = vsub.s32 0, %v689
          %v691 = vrot.slane %v687, %v690
          %v692 = vmul.f32 %v677, %v691
          %v693 = vmul.f32 %v678, %v691
          %v694 = vmul.f32 %v679, %v691
          %v695 = vmul.f32 %v680, %v691
          %v696 = vadd.f32 %v692, 0.0
          %v697 = vadd.f32 %v693, 0.0
          %v698 = vadd.f32 %v694, 0.0
          %v699 = vadd.f32 %v695, 0.0
          %v700 = vld [vmem:[#allocation10 + $0x7] sm:$0x1]
          %v701 = vlaneseq
          %v702 = vshrl.u32 %v701, 7
          %v703 = vsub.s32 0, %v702
          %v704 = vrot.slane %v700, %v703
          %v705 = vmul.f32 %v678, %v704
          %v706 = vmul.f32 %v679, %v704
          %v707 = vmul.f32 %v680, %v704
          %v708 = vmul.f32 %v681, %v704
          %v709 = vadd.f32 %v696, %v705
          %v710 = vadd.f32 %v697, %v706
          %v711 = vadd.f32 %v698, %v707
          %v712 = vadd.f32 %v699, %v708
          %v713 = vld [vmem:[#allocation10 + $0xe] sm:$0x1]
          %v714 = vlaneseq
          %v715 = vshrl.u32 %v714, 7
          %v716 = vsub.s32 0, %v715
          %v717 = vrot.slane %v713, %v716
          %v718 = vmul.f32 %v679, %v717
          %v719 = vmul.f32 %v680, %v717
          %v720 = vmul.f32 %v681, %v717
          %v721 = vmul.f32 %v682, %v717
          %v722 = vadd.f32 %v709, %v718
          %v723 = vadd.f32 %v710, %v719
          %v724 = vadd.f32 %v711, %v720
          %v725 = vadd.f32 %v712, %v721
          %v726 = vld [vmem:[#allocation10 + $0x15] sm:$0x1]
          %v727 = vlaneseq
          %v728 = vshrl.u32 %v727, 7
          %v729 = vsub.s32 0, %v728
          %v730 = vrot.slane %v726, %v729
          %v731 = vmul.f32 %v680, %v730
          %v732 = vmul.f32 %v681, %v730
          %v733 = vmul.f32 %v682, %v730
          %v734 = vmul.f32 %v683, %v730
          %v735 = vadd.f32 %v722, %v731
          %v736 = vadd.f32 %v723, %v732
          %v737 = vadd.f32 %v724, %v733
          %v738 = vadd.f32 %v725, %v734
          %v739 = vld [vmem:[#allocation10 + $0x1c] sm:$0x1]
          %v740 = vlaneseq
          %v741 = vshrl.u32 %v740, 7
          %v742 = vsub.s32 0, %v741
          %v743 = vrot.slane %v739, %v742
          %v744 = vmul.f32 %v681, %v743
          %v745 = vmul.f32 %v682, %v743
          %v746 = vmul.f32 %v683, %v743
          %v747 = vmul.f32 %v684, %v743
          %v748 = vadd.f32 %v735, %v744
          %v749 = vadd.f32 %v736, %v745
          %v750 = vadd.f32 %v737, %v746
          %v751 = vadd.f32 %v738, %v747
          %v752 = vld [vmem:[#allocation10 + $0x23] sm:$0x1]
          %v753 = vlaneseq
          %v754 = vshrl.u32 %v753, 7
          %v755 = vsub.s32 0, %v754
          %v756 = vrot.slane %v752, %v755
          %v757 = vmul.f32 %v682, %v756
          %v758 = vmul.f32 %v683, %v756
          %v759 = vmul.f32 %v684, %v756
          %v760 = vmul.f32 %v685, %v756
          %v761 = vadd.f32 %v748, %v757
          %v762 = vadd.f32 %v749, %v758
          %v763 = vadd.f32 %v750, %v759
          %v764 = vadd.f32 %v751, %v760
          %v765 = vld [vmem:[#allocation10 + $0x2a] sm:$0x1]
          %v766 = vlaneseq
          %v767 = vshrl.u32 %v766, 7
          %v768 = vsub.s32 0, %v767
          %v769 = vrot.slane %v765, %v768
          %v770 = vmul.f32 %v683, %v769
          %v771 = vmul.f32 %v684, %v769
          %v772 = vmul.f32 %v685, %v769
          %v773 = vmul.f32 %v686, %v769
          %v774 = vadd.f32 %v761, %v770
          %v775 = vadd.f32 %v762, %v771
          %v776 = vadd.f32 %v763, %v772
          %v777 = vadd.f32 %v764, %v773
          %v778 = vld [vmem:[%s676 + $0x6] sm:$0xff]
          %v779 = vld [vmem:[%s676 + $0x1e] sm:$0xff]
          %v780 = vld [vmem:[%s676 + $0x36] sm:$0xff]
          %v781 = vld [vmem:[%s676 + $0x4e] sm:$0xff]
          %v782 = vld [vmem:[%s676 + $0x66] sm:$0xff]
          %v783 = vld [vmem:[%s676 + $0x7e] sm:$0xff]
          %v784 = vld [vmem:[%s676 + $0x96] sm:$0xff]
          %v785 = vld [vmem:[%s676 + $0xae] sm:$0xff]
          %v786 = vld [vmem:[%s676 + $0xc6] sm:$0xff]
          %v787 = vld [vmem:[%s676 + $0xde] sm:$0xff]
          %v788 = vld [vmem:[#allocation10 + $0x1] sm:$0x1]
          %v789 = vlaneseq
          %v790 = vshrl.u32 %v789, 7
          %v791 = vsub.s32 0, %v790
          %v792 = vrot.slane %v788, %v791
          %v793 = vmul.f32 %v778, %v792
          %v794 = vmul.f32 %v779, %v792
          %v795 = vmul.f32 %v780, %v792
          %v796 = vmul.f32 %v781, %v792
          %v797 = vadd.f32 %v774, %v793
          %v798 = vadd.f32 %v775, %v794
          %v799 = vadd.f32 %v776, %v795
          %v800 = vadd.f32 %v777, %v796
          %v801 = vld [vmem:[#allocation10 + $0x8] sm:$0x1]
          %v802 = vlaneseq
          %v803 = vshrl.u32 %v802, 7
          %v804 = vsub.s32 0, %v803
          %v805 = vrot.slane %v801, %v804
          %v806 = vmul.f32 %v779, %v805
          %v807 = vmul.f32 %v780, %v805
          %v808 = vmul.f32 %v781, %v805
          %v809 = vmul.f32 %v782, %v805
          %v810 = vadd.f32 %v797, %v806
          %v811 = vadd.f32 %v798, %v807
          %v812 = vadd.f32 %v799, %v808
          %v813 = vadd.f32 %v800, %v809
          %v814 = vld [vmem:[#allocation10 + $0xf] sm:$0x1]
          %v815 = vlaneseq
          %v816 = vshrl.u32 %v815, 7
          %v817 = vsub.s32 0, %v816
          %v818 = vrot.slane %v814, %v817
          %v819 = vmul.f32 %v780, %v818
          %v820 = vmul.f32 %v781, %v818
          %v821 = vmul.f32 %v782, %v818
          %v822 = vmul.f32 %v783, %v818
          %v823 = vadd.f32 %v810, %v819
          %v824 = vadd.f32 %v811, %v820
          %v825 = vadd.f32 %v812, %v821
          %v826 = vadd.f32 %v813, %v822
          %v827 = vld [vmem:[#allocation10 + $0x16] sm:$0x1]
          %v828 = vlaneseq
          %v829 = vshrl.u32 %v828, 7
          %v830 = vsub.s32 0, %v829
          %v831 = vrot.slane %v827, %v830
          %v832 = vmul.f32 %v781, %v831
          %v833 = vmul.f32 %v782, %v831
          %v834 = vmul.f32 %v783, %v831
          %v835 = vmul.f32 %v784, %v831
          %v836 = vadd.f32 %v823, %v832
          %v837 = vadd.f32 %v824, %v833
          %v838 = vadd.f32 %v825, %v834
          %v839 = vadd.f32 %v826, %v835
          %v840 = vld [vmem:[#allocation10 + $0x1d] sm:$0x1]
          %v841 = vlaneseq
          %v842 = vshrl.u32 %v841, 7
          %v843 = vsub.s32 0, %v842
          %v844 = vrot.slane %v840, %v843
          %v845 = vmul.f32 %v782, %v844
          %v846 = vmul.f32 %v783, %v844
          %v847 = vmul.f32 %v784, %v844
          %v848 = vmul.f32 %v785, %v844
          %v849 = vadd.f32 %v836, %v845
          %v850 = vadd.f32 %v837, %v846
          %v851 = vadd.f32 %v838, %v847
          %v852 = vadd.f32 %v839, %v848
          %v853 = vld [vmem:[#allocation10 + $0x24] sm:$0x1]
          %v854 = vlaneseq
          %v855 = vshrl.u32 %v854, 7
          %v856 = vsub.s32 0, %v855
          %v857 = vrot.slane %v853, %v856
          %v858 = vmul.f32 %v783, %v857
          %v859 = vmul.f32 %v784, %v857
          %v860 = vmul.f32 %v785, %v857
          %v861 = vmul.f32 %v786, %v857
          %v862 = vadd.f32 %v849, %v858
          %v863 = vadd.f32 %v850, %v859
          %v864 = vadd.f32 %v851, %v860
          %v865 = vadd.f32 %v852, %v861
          %v866 = vld [vmem:[#allocation10 + $0x2b] sm:$0x1]
          %v867 = vlaneseq
          %v868 = vshrl.u32 %v867, 7
          %v869 = vsub.s32 0, %v868
          %v870 = vrot.slane %v866, %v869
          %v871 = vmul.f32 %v784, %v870
          %v872 = vmul.f32 %v785, %v870
          %v873 = vmul.f32 %v786, %v870
          %v874 = vmul.f32 %v787, %v870
          %v875 = vadd.f32 %v862, %v871
          %v876 = vadd.f32 %v863, %v872
          %v877 = vadd.f32 %v864, %v873
          %v878 = vadd.f32 %v865, %v874
          %v879 = vld [vmem:[%s676 + $0x7] sm:$0xff]
          %v880 = vld [vmem:[%s676 + $0x1f] sm:$0xff]
          %v881 = vld [vmem:[%s676 + $0x37] sm:$0xff]
          %v882 = vld [vmem:[%s676 + $0x4f] sm:$0xff]
          %v883 = vld [vmem:[%s676 + $0x67] sm:$0xff]
          %v884 = vld [vmem:[%s676 + $0x7f] sm:$0xff]
          %v885 = vld [vmem:[%s676 + $0x97] sm:$0xff]
          %v886 = vld [vmem:[%s676 + $0xaf] sm:$0xff]
          %v887 = vld [vmem:[%s676 + $0xc7] sm:$0xff]
          %v888 = vld [vmem:[%s676 + $0xdf] sm:$0xff]
          %v889 = vld [vmem:[#allocation10 + $0x2] sm:$0x1]
          %v890 = vlaneseq
          %v891 = vshrl.u32 %v890, 7
          %v892 = vsub.s32 0, %v891
          %v893 = vrot.slane %v889, %v892
          %v894 = vmul.f32 %v879, %v893
          %v895 = vmul.f32 %v880, %v893
          %v896 = vmul.f32 %v881, %v893
          %v897 = vmul.f32 %v882, %v893
          %v898 = vadd.f32 %v875, %v894
          %v899 = vadd.f32 %v876, %v895
          %v900 = vadd.f32 %v877, %v896
          %v901 = vadd.f32 %v878, %v897
          %v902 = vld [vmem:[#allocation10 + $0x9] sm:$0x1]
          %v903 = vlaneseq
          %v904 = vshrl.u32 %v903, 7
          %v905 = vsub.s32 0, %v904
          %v906 = vrot.slane %v902, %v905
          %v907 = vmul.f32 %v880, %v906
          %v908 = vmul.f32 %v881, %v906
          %v909 = vmul.f32 %v882, %v906
          %v910 = vmul.f32 %v883, %v906
          %v911 = vadd.f32 %v898, %v907
          %v912 = vadd.f32 %v899, %v908
          %v913 = vadd.f32 %v900, %v909
          %v914 = vadd.f32 %v901, %v910
          %v915 = vld [vmem:[#allocation10 + $0x10] sm:$0x1]
          %v916 = vlaneseq
          %v917 = vshrl.u32 %v916, 7
          %v918 = vsub.s32 0, %v917
          %v919 = vrot.slane %v915, %v918
          %v920 = vmul.f32 %v881, %v919
          %v921 = vmul.f32 %v882, %v919
          %v922 = vmul.f32 %v883, %v919
          %v923 = vmul.f32 %v884, %v919
          %v924 = vadd.f32 %v911, %v920
          %v925 = vadd.f32 %v912, %v921
          %v926 = vadd.f32 %v913, %v922
          %v927 = vadd.f32 %v914, %v923
          %v928 = vld [vmem:[#allocation10 + $0x17] sm:$0x1]
          %v929 = vlaneseq
          %v930 = vshrl.u32 %v929, 7
          %v931 = vsub.s32 0, %v930
          %v932 = vrot.slane %v928, %v931
          %v933 = vmul.f32 %v882, %v932
          %v934 = vmul.f32 %v883, %v932
          %v935 = vmul.f32 %v884, %v932
          %v936 = vmul.f32 %v885, %v932
          %v937 = vadd.f32 %v924, %v933
          %v938 = vadd.f32 %v925, %v934
          %v939 = vadd.f32 %v926, %v935
          %v940 = vadd.f32 %v927, %v936
          %v941 = vld [vmem:[#allocation10 + $0x1e] sm:$0x1]
          %v942 = vlaneseq
          %v943 = vshrl.u32 %v942, 7
          %v944 = vsub.s32 0, %v943
          %v945 = vrot.slane %v941, %v944
          %v946 = vmul.f32 %v883, %v945
          %v947 = vmul.f32 %v884, %v945
          %v948 = vmul.f32 %v885, %v945
          %v949 = vmul.f32 %v886, %v945
          %v950 = vadd.f32 %v937, %v946
          %v951 = vadd.f32 %v938, %v947
          %v952 = vadd.f32 %v939, %v948
          %v953 = vadd.f32 %v940, %v949
          %v954 = vld [vmem:[#allocation10 + $0x25] sm:$0x1]
          %v955 = vlaneseq
          %v956 = vshrl.u32 %v955, 7
          %v957 = vsub.s32 0, %v956
          %v958 = vrot.slane %v954, %v957
          %v959 = vmul.f32 %v884, %v958
          %v960 = vmul.f32 %v885, %v958
          %v961 = vmul.f32 %v886, %v958
          %v962 = vmul.f32 %v887, %v958
          %v963 = vadd.f32 %v950, %v959
          %v964 = vadd.f32 %v951, %v960
          %v965 = vadd.f32 %v952, %v961
          %v966 = vadd.f32 %v953, %v962
          %v967 = vld [vmem:[#allocation10 + $0x2c] sm:$0x1]
          %v968 = vlaneseq
          %v969 = vshrl.u32 %v968, 7
          %v970 = vsub.s32 0, %v969
          %v971 = vrot.slane %v967, %v970
          %v972 = vmul.f32 %v885, %v971
          %v973 = vmul.f32 %v886, %v971
          %v974 = vmul.f32 %v887, %v971
          %v975 = vmul.f32 %v888, %v971
          %v976 = vadd.f32 %v963, %v972
          %v977 = vadd.f32 %v964, %v973
          %v978 = vadd.f32 %v965, %v974
          %v979 = vadd.f32 %v966, %v975
          %v980 = vld [vmem:[%s676 + $0x8] sm:$0xff]
          %v981 = vld [vmem:[%s676 + $0x20] sm:$0xff]
          %v982 = vld [vmem:[%s676 + $0x38] sm:$0xff]
          %v983 = vld [vmem:[%s676 + $0x50] sm:$0xff]
          %v984 = vld [vmem:[%s676 + $0x68] sm:$0xff]
          %v985 = vld [vmem:[%s676 + $0x80] sm:$0xff]
          %v986 = vld [vmem:[%s676 + $0x98] sm:$0xff]
          %v987 = vld [vmem:[%s676 + $0xb0] sm:$0xff]
          %v988 = vld [vmem:[%s676 + $0xc8] sm:$0xff]
          %v989 = vld [vmem:[%s676 + $0xe0] sm:$0xff]
          %v990 = vld [vmem:[#allocation10 + $0x3] sm:$0x1]
          %v991 = vlaneseq
          %v992 = vshrl.u32 %v991, 7
          %v993 = vsub.s32 0, %v992
          %v994 = vrot.slane %v990, %v993
          %v995 = vmul.f32 %v980, %v994
          %v996 = vmul.f32 %v981, %v994
          %v997 = vmul.f32 %v982, %v994
          %v998 = vmul.f32 %v983, %v994
          %v999 = vadd.f32 %v976, %v995
          %v1000 = vadd.f32 %v977, %v996
          %v1001 = vadd.f32 %v978, %v997
          %v1002 = vadd.f32 %v979, %v998
          %v1003 = vld [vmem:[#allocation10 + $0xa] sm:$0x1]
          %v1004 = vlaneseq
          %v1005 = vshrl.u32 %v1004, 7
          %v1006 = vsub.s32 0, %v1005
          %v1007 = vrot.slane %v1003, %v1006
          %v1008 = vmul.f32 %v981, %v1007
          %v1009 = vmul.f32 %v982, %v1007
          %v1010 = vmul.f32 %v983, %v1007
          %v1011 = vmul.f32 %v984, %v1007
          %v1012 = vadd.f32 %v999, %v1008
          %v1013 = vadd.f32 %v1000, %v1009
          %v1014 = vadd.f32 %v1001, %v1010
          %v1015 = vadd.f32 %v1002, %v1011
          %v1016 = vld [vmem:[#allocation10 + $0x11] sm:$0x1]
          %v1017 = vlaneseq
          %v1018 = vshrl.u32 %v1017, 7
          %v1019 = vsub.s32 0, %v1018
          %v1020 = vrot.slane %v1016, %v1019
          %v1021 = vmul.f32 %v982, %v1020
          %v1022 = vmul.f32 %v983, %v1020
          %v1023 = vmul.f32 %v984, %v1020
          %v1024 = vmul.f32 %v985, %v1020
          %v1025 = vadd.f32 %v1012, %v1021
          %v1026 = vadd.f32 %v1013, %v1022
          %v1027 = vadd.f32 %v1014, %v1023
          %v1028 = vadd.f32 %v1015, %v1024
          %v1029 = vld [vmem:[#allocation10 + $0x18] sm:$0x1]
          %v1030 = vlaneseq
          %v1031 = vshrl.u32 %v1030, 7
          %v1032 = vsub.s32 0, %v1031
          %v1033 = vrot.slane %v1029, %v1032
          %v1034 = vmul.f32 %v983, %v1033
          %v1035 = vmul.f32 %v984, %v1033
          %v1036 = vmul.f32 %v985, %v1033
          %v1037 = vmul.f32 %v986, %v1033
          %v1038 = vadd.f32 %v1025, %v1034
          %v1039 = vadd.f32 %v1026, %v1035
          %v1040 = vadd.f32 %v1027, %v1036
          %v1041 = vadd.f32 %v1028, %v1037
          %v1042 = vld [vmem:[#allocation10 + $0x1f] sm:$0x1]
          %v1043 = vlaneseq
          %v1044 = vshrl.u32 %v1043, 7
          %v1045 = vsub.s32 0, %v1044
          %v1046 = vrot.slane %v1042, %v1045
          %v1047 = vmul.f32 %v984, %v1046
          %v1048 = vmul.f32 %v985, %v1046
          %v1049 = vmul.f32 %v986, %v1046
          %v1050 = vmul.f32 %v987, %v1046
          %v1051 = vadd.f32 %v1038, %v1047
          %v1052 = vadd.f32 %v1039, %v1048
          %v1053 = vadd.f32 %v1040, %v1049
          %v1054 = vadd.f32 %v1041, %v1050
          %v1055 = vld [vmem:[#allocation10 + $0x26] sm:$0x1]
          %v1056 = vlaneseq
          %v1057 = vshrl.u32 %v1056, 7
          %v1058 = vsub.s32 0, %v1057
          %v1059 = vrot.slane %v1055, %v1058
          %v1060 = vmul.f32 %v985, %v1059
          %v1061 = vmul.f32 %v986, %v1059
          %v1062 = vmul.f32 %v987, %v1059
          %v1063 = vmul.f32 %v988, %v1059
          %v1064 = vadd.f32 %v1051, %v1060
          %v1065 = vadd.f32 %v1052, %v1061
          %v1066 = vadd.f32 %v1053, %v1062
          %v1067 = vadd.f32 %v1054, %v1063
          %v1068 = vld [vmem:[#allocation10 + $0x2d] sm:$0x1]
          %v1069 = vlaneseq
          %v1070 = vshrl.u32 %v1069, 7
          %v1071 = vsub.s32 0, %v1070
          %v1072 = vrot.slane %v1068, %v1071
          %v1073 = vmul.f32 %v986, %v1072
          %v1074 = vmul.f32 %v987, %v1072
          %v1075 = vmul.f32 %v988, %v1072
          %v1076 = vmul.f32 %v989, %v1072
          %v1077 = vadd.f32 %v1064, %v1073
          %v1078 = vadd.f32 %v1065, %v1074
          %v1079 = vadd.f32 %v1066, %v1075
          %v1080 = vadd.f32 %v1067, %v1076
          %v1081 = vld [vmem:[%s676 + $0x9] sm:$0xff]
          %v1082 = vld [vmem:[%s676 + $0x21] sm:$0xff]
          %v1083 = vld [vmem:[%s676 + $0x39] sm:$0xff]
          %v1084 = vld [vmem:[%s676 + $0x51] sm:$0xff]
          %v1085 = vld [vmem:[%s676 + $0x69] sm:$0xff]
          %v1086 = vld [vmem:[%s676 + $0x81] sm:$0xff]
          %v1087 = vld [vmem:[%s676 + $0x99] sm:$0xff]
          %v1088 = vld [vmem:[%s676 + $0xb1] sm:$0xff]
          %v1089 = vld [vmem:[%s676 + $0xc9] sm:$0xff]
          %v1090 = vld [vmem:[%s676 + $0xe1] sm:$0xff]
          %v1091 = vld [vmem:[#allocation10 + $0x4] sm:$0x1]
          %v1092 = vlaneseq
          %v1093 = vshrl.u32 %v1092, 7
          %v1094 = vsub.s32 0, %v1093
          %v1095 = vrot.slane %v1091, %v1094
          %v1096 = vmul.f32 %v1081, %v1095
          %v1097 = vmul.f32 %v1082, %v1095
          %v1098 = vmul.f32 %v1083, %v1095
          %v1099 = vmul.f32 %v1084, %v1095
          %v1100 = vadd.f32 %v1077, %v1096
          %v1101 = vadd.f32 %v1078, %v1097
          %v1102 = vadd.f32 %v1079, %v1098
          %v1103 = vadd.f32 %v1080, %v1099
          %v1104 = vld [vmem:[#allocation10 + $0xb] sm:$0x1]
          %v1105 = vlaneseq
          %v1106 = vshrl.u32 %v1105, 7
          %v1107 = vsub.s32 0, %v1106
          %v1108 = vrot.slane %v1104, %v1107
          %v1109 = vmul.f32 %v1082, %v1108
          %v1110 = vmul.f32 %v1083, %v1108
          %v1111 = vmul.f32 %v1084, %v1108
          %v1112 = vmul.f32 %v1085, %v1108
          %v1113 = vadd.f32 %v1100, %v1109
          %v1114 = vadd.f32 %v1101, %v1110
          %v1115 = vadd.f32 %v1102, %v1111
          %v1116 = vadd.f32 %v1103, %v1112
          %v1117 = vld [vmem:[#allocation10 + $0x12] sm:$0x1]
          %v1118 = vlaneseq
          %v1119 = vshrl.u32 %v1118, 7
          %v1120 = vsub.s32 0, %v1119
          %v1121 = vrot.slane %v1117, %v1120
          %v1122 = vmul.f32 %v1083, %v1121
          %v1123 = vmul.f32 %v1084, %v1121
          %v1124 = vmul.f32 %v1085, %v1121
          %v1125 = vmul.f32 %v1086, %v1121
          %v1126 = vadd.f32 %v1113, %v1122
          %v1127 = vadd.f32 %v1114, %v1123
          %v1128 = vadd.f32 %v1115, %v1124
          %v1129 = vadd.f32 %v1116, %v1125
          %v1130 = vld [vmem:[#allocation10 + $0x19] sm:$0x1]
          %v1131 = vlaneseq
          %v1132 = vshrl.u32 %v1131, 7
          %v1133 = vsub.s32 0, %v1132
          %v1134 = vrot.slane %v1130, %v1133
          %v1135 = vmul.f32 %v1084, %v1134
          %v1136 = vmul.f32 %v1085, %v1134
          %v1137 = vmul.f32 %v1086, %v1134
          %v1138 = vmul.f32 %v1087, %v1134
          %v1139 = vadd.f32 %v1126, %v1135
          %v1140 = vadd.f32 %v1127, %v1136
          %v1141 = vadd.f32 %v1128, %v1137
          %v1142 = vadd.f32 %v1129, %v1138
          %v1143 = vld [vmem:[#allocation10 + $0x20] sm:$0x1]
          %v1144 = vlaneseq
          %v1145 = vshrl.u32 %v1144, 7
          %v1146 = vsub.s32 0, %v1145
          %v1147 = vrot.slane %v1143, %v1146
          %v1148 = vmul.f32 %v1085, %v1147
          %v1149 = vmul.f32 %v1086, %v1147
          %v1150 = vmul.f32 %v1087, %v1147
          %v1151 = vmul.f32 %v1088, %v1147
          %v1152 = vadd.f32 %v1139, %v1148
          %v1153 = vadd.f32 %v1140, %v1149
          %v1154 = vadd.f32 %v1141, %v1150
          %v1155 = vadd.f32 %v1142, %v1151
          %v1156 = vld [vmem:[#allocation10 + $0x27] sm:$0x1]
          %v1157 = vlaneseq
          %v1158 = vshrl.u32 %v1157, 7
          %v1159 = vsub.s32 0, %v1158
          %v1160 = vrot.slane %v1156, %v1159
          %v1161 = vmul.f32 %v1086, %v1160
          %v1162 = vmul.f32 %v1087, %v1160
          %v1163 = vmul.f32 %v1088, %v1160
          %v1164 = vmul.f32 %v1089, %v1160
          %v1165 = vadd.f32 %v1152, %v1161
          %v1166 = vadd.f32 %v1153, %v1162
          %v1167 = vadd.f32 %v1154, %v1163
          %v1168 = vadd.f32 %v1155, %v1164
          %v1169 = vld [vmem:[#allocation10 + $0x2e] sm:$0x1]
          %v1170 = vlaneseq
          %v1171 = vshrl.u32 %v1170, 7
          %v1172 = vsub.s32 0, %v1171
          %v1173 = vrot.slane %v1169, %v1172
          %v1174 = vmul.f32 %v1087, %v1173
          %v1175 = vmul.f32 %v1088, %v1173
          %v1176 = vmul.f32 %v1089, %v1173
          %v1177 = vmul.f32 %v1090, %v1173
          %v1178 = vadd.f32 %v1165, %v1174
          %v1179 = vadd.f32 %v1166, %v1175
          %v1180 = vadd.f32 %v1167, %v1176
          %v1181 = vadd.f32 %v1168, %v1177
          %v1182 = vld [vmem:[%s676 + $0xa] sm:$0xff]
          %v1183 = vld [vmem:[%s676 + $0x22] sm:$0xff]
          %v1184 = vld [vmem:[%s676 + $0x3a] sm:$0xff]
          %v1185 = vld [vmem:[%s676 + $0x52] sm:$0xff]
          %v1186 = vld [vmem:[%s676 + $0x6a] sm:$0xff]
          %v1187 = vld [vmem:[%s676 + $0x82] sm:$0xff]
          %v1188 = vld [vmem:[%s676 + $0x9a] sm:$0xff]
          %v1189 = vld [vmem:[%s676 + $0xb2] sm:$0xff]
          %v1190 = vld [vmem:[%s676 + $0xca] sm:$0xff]
          %v1191 = vld [vmem:[%s676 + $0xe2] sm:$0xff]
          %v1192 = vld [vmem:[#allocation10 + $0x5] sm:$0x1]
          %v1193 = vlaneseq
          %v1194 = vshrl.u32 %v1193, 7
          %v1195 = vsub.s32 0, %v1194
          %v1196 = vrot.slane %v1192, %v1195
          %v1197 = vmul.f32 %v1182, %v1196
          %v1198 = vmul.f32 %v1183, %v1196
          %v1199 = vmul.f32 %v1184, %v1196
          %v1200 = vmul.f32 %v1185, %v1196
          %v1201 = vadd.f32 %v1178, %v1197
          %v1202 = vadd.f32 %v1179, %v1198
          %v1203 = vadd.f32 %v1180, %v1199
          %v1204 = vadd.f32 %v1181, %v1200
          %v1205 = vld [vmem:[#allocation10 + $0xc] sm:$0x1]
          %v1206 = vlaneseq
          %v1207 = vshrl.u32 %v1206, 7
          %v1208 = vsub.s32 0, %v1207
          %v1209 = vrot.slane %v1205, %v1208
          %v1210 = vmul.f32 %v1183, %v1209
          %v1211 = vmul.f32 %v1184, %v1209
          %v1212 = vmul.f32 %v1185, %v1209
          %v1213 = vmul.f32 %v1186, %v1209
          %v1214 = vadd.f32 %v1201, %v1210
          %v1215 = vadd.f32 %v1202, %v1211
          %v1216 = vadd.f32 %v1203, %v1212
          %v1217 = vadd.f32 %v1204, %v1213
          %v1218 = vld [vmem:[#allocation10 + $0x13] sm:$0x1]
          %v1219 = vlaneseq
          %v1220 = vshrl.u32 %v1219, 7
          %v1221 = vsub.s32 0, %v1220
          %v1222 = vrot.slane %v1218, %v1221
          %v1223 = vmul.f32 %v1184, %v1222
          %v1224 = vmul.f32 %v1185, %v1222
          %v1225 = vmul.f32 %v1186, %v1222
          %v1226 = vmul.f32 %v1187, %v1222
          %v1227 = vadd.f32 %v1214, %v1223
          %v1228 = vadd.f32 %v1215, %v1224
          %v1229 = vadd.f32 %v1216, %v1225
          %v1230 = vadd.f32 %v1217, %v1226
          %v1231 = vld [vmem:[#allocation10 + $0x1a] sm:$0x1]
          %v1232 = vlaneseq
          %v1233 = vshrl.u32 %v1232, 7
          %v1234 = vsub.s32 0, %v1233
          %v1235 = vrot.slane %v1231, %v1234
          %v1236 = vmul.f32 %v1185, %v1235
          %v1237 = vmul.f32 %v1186, %v1235
          %v1238 = vmul.f32 %v1187, %v1235
          %v1239 = vmul.f32 %v1188, %v1235
          %v1240 = vadd.f32 %v1227, %v1236
          %v1241 = vadd.f32 %v1228, %v1237
          %v1242 = vadd.f32 %v1229, %v1238
          %v1243 = vadd.f32 %v1230, %v1239
          %v1244 = vld [vmem:[#allocation10 + $0x21] sm:$0x1]
          %v1245 = vlaneseq
          %v1246 = vshrl.u32 %v1245, 7
          %v1247 = vsub.s32 0, %v1246
          %v1248 = vrot.slane %v1244, %v1247
          %v1249 = vmul.f32 %v1186, %v1248
          %v1250 = vmul.f32 %v1187, %v1248
          %v1251 = vmul.f32 %v1188, %v1248
          %v1252 = vmul.f32 %v1189, %v1248
          %v1253 = vadd.f32 %v1240, %v1249
          %v1254 = vadd.f32 %v1241, %v1250
          %v1255 = vadd.f32 %v1242, %v1251
          %v1256 = vadd.f32 %v1243, %v1252
          %v1257 = vld [vmem:[#allocation10 + $0x28] sm:$0x1]
          %v1258 = vlaneseq
          %v1259 = vshrl.u32 %v1258, 7
          %v1260 = vsub.s32 0, %v1259
          %v1261 = vrot.slane %v1257, %v1260
          %v1262 = vmul.f32 %v1187, %v1261
          %v1263 = vmul.f32 %v1188, %v1261
          %v1264 = vmul.f32 %v1189, %v1261
          %v1265 = vmul.f32 %v1190, %v1261
          %v1266 = vadd.f32 %v1253, %v1262
          %v1267 = vadd.f32 %v1254, %v1263
          %v1268 = vadd.f32 %v1255, %v1264
          %v1269 = vadd.f32 %v1256, %v1265
          %v1270 = vld [vmem:[#allocation10 + $0x2f] sm:$0x1]
          %v1271 = vlaneseq
          %v1272 = vshrl.u32 %v1271, 7
          %v1273 = vsub.s32 0, %v1272
          %v1274 = vrot.slane %v1270, %v1273
          %v1275 = vmul.f32 %v1188, %v1274
          %v1276 = vmul.f32 %v1189, %v1274
          %v1277 = vmul.f32 %v1190, %v1274
          %v1278 = vmul.f32 %v1191, %v1274
          %v1279 = vadd.f32 %v1266, %v1275
          %v1280 = vadd.f32 %v1267, %v1276
          %v1281 = vadd.f32 %v1268, %v1277
          %v1282 = vadd.f32 %v1269, %v1278
          %v1283 = vld [vmem:[%s676 + $0xb] sm:$0xff]
          %v1284 = vld [vmem:[%s676 + $0x23] sm:$0xff]
          %v1285 = vld [vmem:[%s676 + $0x3b] sm:$0xff]
          %v1286 = vld [vmem:[%s676 + $0x53] sm:$0xff]
          %v1287 = vld [vmem:[%s676 + $0x6b] sm:$0xff]
          %v1288 = vld [vmem:[%s676 + $0x83] sm:$0xff]
          %v1289 = vld [vmem:[%s676 + $0x9b] sm:$0xff]
          %v1290 = vld [vmem:[%s676 + $0xb3] sm:$0xff]
          %v1291 = vld [vmem:[%s676 + $0xcb] sm:$0xff]
          %v1292 = vld [vmem:[%s676 + $0xe3] sm:$0xff]
          %v1293 = vld [vmem:[#allocation10 + $0x6] sm:$0x1]
          %v1294 = vlaneseq
          %v1295 = vshrl.u32 %v1294, 7
          %v1296 = vsub.s32 0, %v1295
          %v1297 = vrot.slane %v1293, %v1296
          %v1298 = vmul.f32 %v1283, %v1297
          %v1299 = vmul.f32 %v1284, %v1297
          %v1300 = vmul.f32 %v1285, %v1297
          %v1301 = vmul.f32 %v1286, %v1297
          %v1302 = vadd.f32 %v1279, %v1298
          %v1303 = vadd.f32 %v1280, %v1299
          %v1304 = vadd.f32 %v1281, %v1300
          %v1305 = vadd.f32 %v1282, %v1301
          %v1306 = vld [vmem:[#allocation10 + $0xd] sm:$0x1]
          %v1307 = vlaneseq
          %v1308 = vshrl.u32 %v1307, 7
          %v1309 = vsub.s32 0, %v1308
          %v1310 = vrot.slane %v1306, %v1309
          %v1311 = vmul.f32 %v1284, %v1310
          %v1312 = vmul.f32 %v1285, %v1310
          %v1313 = vmul.f32 %v1286, %v1310
          %v1314 = vmul.f32 %v1287, %v1310
          %v1315 = vadd.f32 %v1302, %v1311
          %v1316 = vadd.f32 %v1303, %v1312
          %v1317 = vadd.f32 %v1304, %v1313
          %v1318 = vadd.f32 %v1305, %v1314
          %v1319 = vld [vmem:[#allocation10 + $0x14] sm:$0x1]
          %v1320 = vlaneseq
          %v1321 = vshrl.u32 %v1320, 7
          %v1322 = vsub.s32 0, %v1321
          %v1323 = vrot.slane %v1319, %v1322
          %v1324 = vmul.f32 %v1285, %v1323
          %v1325 = vmul.f32 %v1286, %v1323
          %v1326 = vmul.f32 %v1287, %v1323
          %v1327 = vmul.f32 %v1288, %v1323
          %v1328 = vadd.f32 %v1315, %v1324
          %v1329 = vadd.f32 %v1316, %v1325
          %v1330 = vadd.f32 %v1317, %v1326
          %v1331 = vadd.f32 %v1318, %v1327
          %v1332 = vld [vmem:[#allocation10 + $0x1b] sm:$0x1]
          %v1333 = vlaneseq
          %v1334 = vshrl.u32 %v1333, 7
          %v1335 = vsub.s32 0, %v1334
          %v1336 = vrot.slane %v1332, %v1335
          %v1337 = vmul.f32 %v1286, %v1336
          %v1338 = vmul.f32 %v1287, %v1336
          %v1339 = vmul.f32 %v1288, %v1336
          %v1340 = vmul.f32 %v1289, %v1336
          %v1341 = vadd.f32 %v1328, %v1337
          %v1342 = vadd.f32 %v1329, %v1338
          %v1343 = vadd.f32 %v1330, %v1339
          %v1344 = vadd.f32 %v1331, %v1340
          %v1345 = vld [vmem:[#allocation10 + $0x22] sm:$0x1]
          %v1346 = vlaneseq
          %v1347 = vshrl.u32 %v1346, 7
          %v1348 = vsub.s32 0, %v1347
          %v1349 = vrot.slane %v1345, %v1348
          %v1350 = vmul.f32 %v1287, %v1349
          %v1351 = vmul.f32 %v1288, %v1349
          %v1352 = vmul.f32 %v1289, %v1349
          %v1353 = vmul.f32 %v1290, %v1349
          %v1354 = vadd.f32 %v1341, %v1350
          %v1355 = vadd.f32 %v1342, %v1351
          %v1356 = vadd.f32 %v1343, %v1352
          %v1357 = vadd.f32 %v1344, %v1353
          %v1358 = vld [vmem:[#allocation10 + $0x29] sm:$0x1]
          %v1359 = vlaneseq
          %v1360 = vshrl.u32 %v1359, 7
          %v1361 = vsub.s32 0, %v1360
          %v1362 = vrot.slane %v1358, %v1361
          %v1363 = vmul.f32 %v1288, %v1362
          %v1364 = vmul.f32 %v1289, %v1362
          %v1365 = vmul.f32 %v1290, %v1362
          %v1366 = vmul.f32 %v1291, %v1362
          %v1367 = vadd.f32 %v1354, %v1363
          %v1368 = vadd.f32 %v1355, %v1364
          %v1369 = vadd.f32 %v1356, %v1365
          %v1370 = vadd.f32 %v1357, %v1366
          %v1371 = vld [vmem:[#allocation10 + $0x30] sm:$0x1]
          %v1372 = vlaneseq
          %v1373 = vshrl.u32 %v1372, 7
          %v1374 = vsub.s32 0, %v1373
          %v1375 = vrot.slane %v1371, %v1374
          %v1376 = vmul.f32 %v1289, %v1375
          %v1377 = vmul.f32 %v1290, %v1375
          %v1378 = vmul.f32 %v1291, %v1375
          %v1379 = vmul.f32 %v1292, %v1375
          %v1380 = vadd.f32 %v1367, %v1376
          %v1381 = vadd.f32 %v1368, %v1377
          %v1382 = vadd.f32 %v1369, %v1378
          %v1383 = vadd.f32 %v1370, %v1379
          %v1384 = vld [vmem:[#allocation12] sm:$0x1]
          %v1386 = vlaneseq
          %v1387 = vshrl.u32 %v1386, 7
          %v1388 = vsub.s32 0, %v1387
          %v1389 = vrot.slane %v1384, %v1388
          %v1391 = vadd.f32 %v1380, %v1389
          %v1392 = vadd.f32 %v1381, %v1389
          %v1393 = vadd.f32 %v1382, %v1389
          %v1394 = vadd.f32 %v1383, %v1389
          %v1395 = vpack.c.bf16 %v1391, %v1391
          %v1396 = vpack.c.bf16 %v1392, %v1392
          %v1397 = vpack.c.bf16 %v1393, %v1393
          %v1398 = vpack.c.bf16 %v1394, %v1394
          %1399 = vst [vmem:[%s326] sm:$0xf] %v1395
          %1400 = vst [vmem:[%s326 + $0x4] sm:$0xf] %v1396
          %1401 = vst [vmem:[%s326 + $0x8] sm:$0xf] %v1397
          %1402 = vst [vmem:[%s326 + $0xc] sm:$0xf] %v1398
        $region72: #{tpu_custom_call.1} parent=39 // pred_fallthru
          _
        %s1403 = sand.u32 %s168, 1
        %s1404 = scalar_lea.sflag [#allocation6], %s1403
        %s1405 = sand.u32 %s168, 1
        %s1406 = smul.addr %s1405, 16
        %s1407 = scalar_lea.vmem [#allocation13], %s1406
        // Predicated region
        $region73: #{tpu_custom_call.1} parent=39 // pred_check
          %p1408 = pneg %p178
        $region74: #{tpu_custom_call.1} parent=39 // pred_check_branch
          %1410 = sbr.rel (%p1408) target = $region76
        $region75: #{tpu_custom_call.1} parent=39 // pred_region
          %s1411 = ssub.s32 %s29, 1
          %p1412 = scmp.gt.s32.totalorder %s1411, 0
          %s1413 = scalar_select %p1412, %s1411, 0
          %s1414 = smul.u32 4, %s1413
          %s1416 = ssub.s32 256, 256
          %1417 = vsyncadd %s1404, %s1416
          %s1418 = smul.addr %s28, 8
          %s1419 = sadd.s32 %s1414, %s1418
          %s1420 = smul.addr %s1419, 64
          %s1421 = scalar_lea.hbm %s5, %s1420
          %s1422 = sshll.u32 %s1407, 4
          %s1423 = int_to_ptr.vmem [resolvable:$true] %s1422
          %1428 = dma.vmem_to_hbm [thread:$0]  %s1423, 256, %s1421, %s1404, 64, 64, 4
        $region76: #{tpu_custom_call.1} parent=39 // pred_fallthru
          _
      $region40: #{tpu_custom_call.1} parent=5 // pred_fallthru
        _
      %p1429 = scmp.le.s32.totalorder 2, %s19
      // Predicated region
      $region77: #{tpu_custom_call.1} parent=5 // pred_check
        %p1430 = pneg %p1429
      $region78: #{tpu_custom_call.1} parent=5 // pred_check_branch
        %1432 = sbr.rel (%p1430) target = $region80
      $region79: #{tpu_custom_call.1} parent=5 // pred_region
        %s1433 = ssub.s32 %s19, 2
        // Predicated region
        $region81: #{tpu_custom_call.1} parent=79 // pred_check
          %p1434 = pneg %p184
        $region82: #{tpu_custom_call.1} parent=79 // pred_check_branch
          %1436 = sbr.rel (%p1434) target = $region84
        $region83: #{tpu_custom_call.1} parent=79 // pred_region
          %s1437 = sand.u32 %s169, 1
          %s1438 = scalar_lea.sflag [#allocation6], %s1437
          %s1439 = sand.u32 %s169, 1
          %s1440 = smul.addr %s1439, 16
          %s1441 = scalar_lea.vmem [#allocation13], %s1440
          %1442 = dma.done %s1438, 256
        $region84: #{tpu_custom_call.1} parent=79 // pred_fallthru
          _
      $region80: #{tpu_custom_call.1} parent=5 // pred_fallthru
        _
    $region6: #{tpu_custom_call.1} parent=1 // loop_footer
      %s23 = sadd.s32 1, %s19
    $region7: #{tpu_custom_call.1} parent=1 // loop_footer_branch
      %18 = sbr.rel target = $region3
    $region8: #{tpu_custom_call.1} parent=1 // loop_exit
      _
    %1443 = vsyncpa [#allocation5], 1
    %s1444 = scalar_lea.sflag [#allocation5], 1
    %1445 = vsyncpa %s1444, 1
    %1446 = vsyncpa [#allocation8], 1
    %1447 = vsyncpa [#allocation11], 1
    %1448 = vsyncpa [#allocation6], 1
    %s1449 = scalar_lea.sflag [#allocation6], 1
    %1450 = vsyncpa %s1449, 1

</llo_original>
